<compile_context>
chip_gen: v6e
topology: v6e:2x2x1
jax: 0.10.0
libtpu: 0.0.40
codegen_flags: <defaults>
</compile_context>

<pallas_src>
import functools
import math

import jax
import jax.numpy as jnp
from jax import lax
from jax.experimental import pallas as pl
from jax.experimental.pallas import tpu as pltpu

LN_EPS = 1e-5        # config.layer_norm_epsilon
MASK_VALUE = -1e4    # HF openai-gpt causal fill value


def _layer_norm(h, g, b):
    mu = jnp.mean(h, axis=-1, keepdims=True)
    var = jnp.mean((h - mu) ** 2, axis=-1, keepdims=True)
    return (h - mu) * lax.rsqrt(var + LN_EPS) * g + b


def _gelu(x):
    # OpenAI GPT tanh-approximation gelu (tanh runs on the EUP slot)
    c = math.sqrt(2.0 / math.pi)
    return 0.5 * x * (1.0 + jnp.tanh(c * (x + 0.044715 * x * x * x)))


def block_kernel(n_head, scale, use_bf16_act,
                 x_q_ref, x_kv_ref,
                 w_q_ref, b_q_ref, w_k_ref, b_k_ref, w_v_ref, b_v_ref,
                 w_ap_ref, b_ap_ref, g1_ref, b1_ref,
                 w_fc_ref, b_fc_ref, w_mp_ref, b_mp_ref, g2_ref, b2_ref,
                 out_ref, k_cache, v_cache):
    qi = pl.program_id(1)
    TQ, C = out_ref.shape[1], out_ref.shape[2]
    T = k_cache.shape[0]
    hd = C // n_head

    # ---- K/V projection for the full sequence, once per batch element -------
    @pl.when(qi == 0)
    def _():
        xkv = x_kv_ref[0].astype(jnp.bfloat16)                       # (T, C)
        k = jnp.dot(xkv, w_k_ref[...], preferred_element_type=jnp.float32) + b_k_ref[...]
        v = jnp.dot(xkv, w_v_ref[...], preferred_element_type=jnp.float32) + b_v_ref[...]
        k_cache[...] = k.astype(jnp.bfloat16)
        v_cache[...] = v.astype(jnp.bfloat16)

    x_f32 = x_q_ref[0].astype(jnp.float32)                           # (TQ, C) residual path
    x_bf = x_q_ref[0].astype(jnp.bfloat16)

    # ---- Q projection for this query tile ------------------------------------
    q = jnp.dot(x_bf, w_q_ref[...], preferred_element_type=jnp.float32) + b_q_ref[...]
    if scale:
        q = q * jnp.float32(1.0 / math.sqrt(hd))   # == scores / sqrt(head_dim)
    q_bf = q.astype(jnp.bfloat16)

    # 2-D causal mask shared by every head (no per-head iota cubes)
    rows = qi * TQ + lax.broadcasted_iota(jnp.int32, (TQ, T), 0)
    cols = lax.broadcasted_iota(jnp.int32, (TQ, T), 1)
    causal = cols <= rows

    k_all = k_cache[...]
    v_all = v_cache[...]
    w_ap = w_ap_ref[...]

    # ---- Attention, one head at a time; head-merge fused into c_proj ---------
    nt_dims = (((1,), (1,)), ((), ()))   # contract last dims (q @ k^T), no batch
    a = None
    for h in range(n_head):
        lo = h * hd
        q_h = q_bf[:, lo:lo + hd]                                     # (TQ, hd)
        s = lax.dot_general(q_h, k_all[:, lo:lo + hd], nt_dims,
                            preferred_element_type=jnp.float32)       # (TQ, T)
        s = jnp.where(causal, s, jnp.float32(MASK_VALUE))
        s = s - jnp.max(s, axis=-1, keepdims=True)
        p = jnp.exp(s)
        p = p * pl.reciprocal(jnp.sum(p, axis=-1, keepdims=True), approx=True)
        ctx = jnp.dot(p.astype(jnp.bfloat16), v_all[:, lo:lo + hd],
                      preferred_element_type=jnp.float32)             # (TQ, hd)
        contrib = jnp.dot(ctx.astype(jnp.bfloat16), w_ap[lo:lo + hd, :],
                          preferred_element_type=jnp.float32)         # (TQ, C)
        a = contrib if a is None else a + contrib
    a = a + b_ap_ref[...]

    # ---- n = ln_1(x + a)  (f32) ----------------------------------------------
    n = _layer_norm(x_f32 + a, g1_ref[...], b1_ref[...])

    # ---- MLP: c_fc -> gelu -> c_proj -----------------------------------------
    hfc = jnp.dot(n.astype(jnp.bfloat16), w_fc_ref[...],
                  preferred_element_type=jnp.float32) + b_fc_ref[...]  # (TQ, 4C)
    act_dtype = jnp.bfloat16 if use_bf16_act else jnp.float32
    g = _gelu(hfc.astype(act_dtype))
    m = jnp.dot(g.astype(jnp.bfloat16), w_mp_ref[...],
                preferred_element_type=jnp.float32) + b_mp_ref[...]    # (TQ, C)

    # ---- h = ln_2(n + m)  (f32) -----------------------------------------------
    out_ref[0] = _layer_norm(n + m, g2_ref[...], b2_ref[...]).astype(out_ref.dtype)


def _pick_q_tile(T):
    if T <= 256:
        return T
    for tq in (256, 128, 64, 32, 16, 8):
        if T % tq == 0:
            return tq
    return T


def _vmem_limit_bytes():
    # 3/4 of per-core VMEM, capped; safe fallback if the query is unavailable.
    try:
        cap = int(pltpu.get_tpu_info().vmem_capacity_bytes)
    except Exception:
        return 48 * 1024 * 1024
    return min((cap * 3) // 4, 100 * 1024 * 1024)


def _use_bf16_activations():
    # bf16 VPU/EUP exists on v6e/v7x; v5-generation chips stay f32 for gelu.
    try:
        return "v5" not in jax.devices()[0].device_kind.lower()
    except Exception:
        return True


def gpt_block(x, params, n_head=4, scale=True):
    (w_attn, b_attn, w_aproj, b_aproj, g1, b1,
     w_fc, b_fc, w_mproj, b_mproj, g2, b2) = params
    B, T, C = x.shape
    assert C % n_head == 0, "n_embd must be divisible by n_head"
    hd = C // n_head

    bf, f32 = jnp.bfloat16, jnp.float32
    # Split the fused c_attn Conv1D into q/k/v projections (wrapper-side layout
    # change only; forward math is unchanged).  Matmul weights -> bf16; biases
    # and LayerNorm params stay f32.
    wp = (w_attn[:, :C].astype(bf),        b_attn[:, :C].astype(f32),
          w_attn[:, C:2 * C].astype(bf),   b_attn[:, C:2 * C].astype(f32),
          w_attn[:, 2 * C:].astype(bf),    b_attn[:, 2 * C:].astype(f32),
          w_aproj.astype(bf), b_aproj.astype(f32),
          g1.astype(f32), b1.astype(f32),
          w_fc.astype(bf), b_fc.astype(f32),
          w_mproj.astype(bf), b_mproj.astype(f32),
          g2.astype(f32), b2.astype(f32))

    TQ = _pick_q_tile(T)
    assert T % TQ == 0
    NQ = T // TQ

    def wspec(arr):
        # grid-invariant parameter: single-buffered (no point double-buffering
        # blocks whose index never changes) — halves weight VMEM.
        return pl.BlockSpec(arr.shape, lambda b, q: (0, 0),
                            pipeline_mode=pl.Buffered(buffer_count=1))

    in_specs = [pl.BlockSpec((1, TQ, C), lambda b, q: (b, q, 0)),  # query tile
                pl.BlockSpec((1, T, C), lambda b, q: (b, 0, 0))]   # full seq for K/V
    in_specs += [wspec(p) for p in wp]
    out_specs = pl.BlockSpec((1, TQ, C), lambda b, q: (b, q, 0))

    # advisory cost hint so XLA schedules around the fused call sensibly
    flops = B * (2 * T * C * (3 * C)            # q/k/v projections
                 + 4 * n_head * T * T * hd      # q@k^T and p@v
                 + 2 * T * C * C                # attn c_proj
                 + 2 * T * C * (4 * C)          # mlp c_fc
                 + 2 * T * (4 * C) * C)         # mlp c_proj
    transcendentals = B * (n_head * T * T + 4 * T * C)   # softmax exp + gelu tanh
    bytes_accessed = (2 * B * T * C * x.dtype.itemsize
                      + sum(int(p.size) * p.dtype.itemsize for p in wp))
    cost = pl.CostEstimate(flops=int(flops),
                           transcendentals=int(transcendentals),
                           bytes_accessed=int(bytes_accessed))

    kernel = functools.partial(block_kernel, n_head, scale, _use_bf16_activations())

    return pl.pallas_call(
        kernel,
        out_shape=jax.ShapeDtypeStruct((B, T, C), x.dtype),
        grid_spec=pltpu.PrefetchScalarGridSpec(
            num_scalar_prefetch=0,
            grid=(B, NQ),                   # batch (parallel) x query tiles
            in_specs=in_specs,
            out_specs=out_specs,
            scratch_shapes=[pltpu.VMEM((T, C), jnp.bfloat16),   # K cache
                            pltpu.VMEM((T, C), jnp.bfloat16)]), # V cache
        compiler_params=pltpu.CompilerParams(
            # q axis is "arbitrary" so the per-batch K/V projection is computed
            # once (q-tile 0) and reused from VMEM scratch by later tiles.
            dimension_semantics=("parallel", "arbitrary"),
            vmem_limit_bytes=_vmem_limit_bytes()),
        cost_estimate=cost,
    )(x, x, *wp)


def init_params(key, C):
    # f32 params matching the PyTorch module; matmul weights are cast to bf16
    # inside gpt_block.
    ks = jax.random.split(key, 4)
    w_attn  = 0.02 * jax.random.normal(ks[0], (C, 3 * C), jnp.float32)   # c_attn
    b_attn  = jnp.zeros((1, 3 * C), jnp.float32)
    w_aproj = 0.02 * jax.random.normal(ks[1], (C, C), jnp.float32)       # attn c_proj
    b_aproj = jnp.zeros((1, C), jnp.float32)
    g1 = jnp.ones((1, C), jnp.float32)                                   # ln_1
    b1 = jnp.zeros((1, C), jnp.float32)
    w_fc    = 0.02 * jax.random.normal(ks[2], (C, 4 * C), jnp.float32)   # mlp c_fc
    b_fc    = jnp.zeros((1, 4 * C), jnp.float32)
    w_mproj = 0.02 * jax.random.normal(ks[3], (4 * C, C), jnp.float32)   # mlp c_proj
    b_mproj = jnp.zeros((1, C), jnp.float32)
    g2 = jnp.ones((1, C), jnp.float32)                                   # ln_2
    b2 = jnp.zeros((1, C), jnp.float32)
    return (w_attn, b_attn, w_aproj, b_aproj, g1, b1,
            w_fc, b_fc, w_mproj, b_mproj, g2, b2)


if __name__ == "__main__":
    # NOTE: tiny harness shapes; real GPT-1 is T=512, C=768, n_head=12 (pass
    # n_head=12 to gpt_block for that config).
    B, T, C = 2, 8, 32      # batch, seq (n_ctx), n_embd; n_head = 4, head_dim = 8
    key = jax.random.PRNGKey(0)
    kx, kp = jax.random.split(key)
    x = jax.random.normal(kx, (B, T, C), jnp.float32)
    params = init_params(kp, C)

    out = gpt_block(x, params, n_head=4, scale=True)
    jax.block_until_ready(out)
    assert out.shape == (B, T, C)
    print("KERNEL_OK")
</pallas_src>

<mosaic_0001>
module attributes {stable_mosaic.version = 11 : i64} {
  func.func @block_kernel(%arg0: i32, %arg1: i32, %arg2: memref<1x8x32xf32, #tpu.memory_space<vmem>>, %arg3: memref<1x8x32xf32, #tpu.memory_space<vmem>>, %arg4: memref<32x32xbf16, #tpu.memory_space<vmem>>, %arg5: memref<1x32xf32, #tpu.memory_space<vmem>>, %arg6: memref<32x32xbf16, #tpu.memory_space<vmem>>, %arg7: memref<1x32xf32, #tpu.memory_space<vmem>>, %arg8: memref<32x32xbf16, #tpu.memory_space<vmem>>, %arg9: memref<1x32xf32, #tpu.memory_space<vmem>>, %arg10: memref<32x32xbf16, #tpu.memory_space<vmem>>, %arg11: memref<1x32xf32, #tpu.memory_space<vmem>>, %arg12: memref<1x32xf32, #tpu.memory_space<vmem>>, %arg13: memref<1x32xf32, #tpu.memory_space<vmem>>, %arg14: memref<32x128xbf16, #tpu.memory_space<vmem>>, %arg15: memref<1x128xf32, #tpu.memory_space<vmem>>, %arg16: memref<128x32xbf16, #tpu.memory_space<vmem>>, %arg17: memref<1x32xf32, #tpu.memory_space<vmem>>, %arg18: memref<1x32xf32, #tpu.memory_space<vmem>>, %arg19: memref<1x32xf32, #tpu.memory_space<vmem>>, %arg20: memref<1x8x32xf32, #tpu.memory_space<vmem>>, %arg21: memref<8x32xbf16, #tpu.memory_space<vmem>>, %arg22: memref<8x32xbf16, #tpu.memory_space<vmem>>) attributes {dimension_semantics = [#tpu.dimension_semantics<parallel>, #tpu.dimension_semantics<arbitrary>], iteration_bounds = array<i64: 2, 1>, scalar_prefetch = 0 : i64, scratch_operands = 2 : i64, tpu.core_type = #tpu.core_type<tc>, window_params = [{transform_indices = @transform_0, window_bounds = array<i64: 1, 8, 32>}, {transform_indices = @transform_1, window_bounds = array<i64: 1, 8, 32>}, {pipeline_mode = #tpu.pipeline_mode<synchronous>, transform_indices = @transform_2, window_bounds = array<i64: 32, 32>}, {pipeline_mode = #tpu.pipeline_mode<synchronous>, transform_indices = @transform_3, window_bounds = array<i64: 1, 32>}, {pipeline_mode = #tpu.pipeline_mode<synchronous>, transform_indices = @transform_4, window_bounds = array<i64: 32, 32>}, {pipeline_mode = #tpu.pipeline_mode<synchronous>, transform_indices = @transform_5, window_bounds = array<i64: 1, 32>}, {pipeline_mode = #tpu.pipeline_mode<synchronous>, transform_indices = @transform_6, window_bounds = array<i64: 32, 32>}, {pipeline_mode = #tpu.pipeline_mode<synchronous>, transform_indices = @transform_7, window_bounds = array<i64: 1, 32>}, {pipeline_mode = #tpu.pipeline_mode<synchronous>, transform_indices = @transform_8, window_bounds = array<i64: 32, 32>}, {pipeline_mode = #tpu.pipeline_mode<synchronous>, transform_indices = @transform_9, window_bounds = array<i64: 1, 32>}, {pipeline_mode = #tpu.pipeline_mode<synchronous>, transform_indices = @transform_10, window_bounds = array<i64: 1, 32>}, {pipeline_mode = #tpu.pipeline_mode<synchronous>, transform_indices = @transform_11, window_bounds = array<i64: 1, 32>}, {pipeline_mode = #tpu.pipeline_mode<synchronous>, transform_indices = @transform_12, window_bounds = array<i64: 32, 128>}, {pipeline_mode = #tpu.pipeline_mode<synchronous>, transform_indices = @transform_13, window_bounds = array<i64: 1, 128>}, {pipeline_mode = #tpu.pipeline_mode<synchronous>, transform_indices = @transform_14, window_bounds = array<i64: 128, 32>}, {pipeline_mode = #tpu.pipeline_mode<synchronous>, transform_indices = @transform_15, window_bounds = array<i64: 1, 32>}, {pipeline_mode = #tpu.pipeline_mode<synchronous>, transform_indices = @transform_16, window_bounds = array<i64: 1, 32>}, {pipeline_mode = #tpu.pipeline_mode<synchronous>, transform_indices = @transform_17, window_bounds = array<i64: 1, 32>}, {transform_indices = @transform_18, window_bounds = array<i64: 1, 8, 32>}]} {
    %c0_i32 = arith.constant 0 : i32
    %0 = arith.cmpi eq, %arg1, %c0_i32 : i32
    %1 = arith.extui %0 : i1 to i32
    %c0_i32_0 = arith.constant 0 : i32
    %2 = arith.cmpi ne, %1, %c0_i32_0 : i32
    scf.if %2 {
      %c0_78 = arith.constant 0 : index
      %c0_79 = arith.constant 0 : index
      %c0_80 = arith.constant 0 : index
      %193 = vector.load %arg3[%c0_78, %c0_79, %c0_80] : memref<1x8x32xf32, #tpu.memory_space<vmem>>, vector<1x8x32xf32>
      %194 = vector.shape_cast %193 : vector<1x8x32xf32> to vector<8x32xf32>
      %195 = arith.truncf %194 : vector<8x32xf32> to vector<8x32xbf16>
      %c0_81 = arith.constant 0 : index
      %c0_82 = arith.constant 0 : index
      %196 = vector.load %arg6[%c0_81, %c0_82] : memref<32x32xbf16, #tpu.memory_space<vmem>>, vector<32x32xbf16>
      %cst_83 = arith.constant dense<0.000000e+00> : vector<8x32xf32>
      %197 = tpu.matmul %195, %196, %cst_83 {dimension_numbers = #tpu.dot_dimension_numbers<[1], [0], [0], [1], [0, 0, 1, 1], [], []>} : vector<8x32xbf16>, vector<32x32xbf16>, vector<8x32xf32> -> vector<8x32xf32>
      %c0_84 = arith.constant 0 : index
      %c0_85 = arith.constant 0 : index
      %198 = vector.load %arg7[%c0_84, %c0_85] : memref<1x32xf32, #tpu.memory_space<vmem>>, vector<1x32xf32>
      %199 = vector.broadcast %198 : vector<1x32xf32> to vector<8x32xf32>
      %200 = arith.addf %197, %199 : vector<8x32xf32>
      %c0_86 = arith.constant 0 : index
      %c0_87 = arith.constant 0 : index
      %201 = vector.load %arg8[%c0_86, %c0_87] : memref<32x32xbf16, #tpu.memory_space<vmem>>, vector<32x32xbf16>
      %cst_88 = arith.constant dense<0.000000e+00> : vector<8x32xf32>
      %202 = tpu.matmul %195, %201, %cst_88 {dimension_numbers = #tpu.dot_dimension_numbers<[1], [0], [0], [1], [0, 0, 1, 1], [], []>} : vector<8x32xbf16>, vector<32x32xbf16>, vector<8x32xf32> -> vector<8x32xf32>
      %c0_89 = arith.constant 0 : index
      %c0_90 = arith.constant 0 : index
      %203 = vector.load %arg9[%c0_89, %c0_90] : memref<1x32xf32, #tpu.memory_space<vmem>>, vector<1x32xf32>
      %204 = vector.broadcast %203 : vector<1x32xf32> to vector<8x32xf32>
      %205 = arith.addf %202, %204 : vector<8x32xf32>
      %206 = arith.truncf %200 : vector<8x32xf32> to vector<8x32xbf16>
      %c0_91 = arith.constant 0 : index
      %c0_92 = arith.constant 0 : index
      %207 = vector.load %arg21[%c0_91, %c0_92] : memref<8x32xbf16, #tpu.memory_space<vmem>>, vector<8x32xbf16>
      tpu.vector_store %arg21[%c0_91, %c0_92], %206 {strides = array<i32>} : memref<8x32xbf16, #tpu.memory_space<vmem>>, vector<8x32xbf16>,
      %208 = arith.truncf %205 : vector<8x32xf32> to vector<8x32xbf16>
      %c0_93 = arith.constant 0 : index
      %c0_94 = arith.constant 0 : index
      %209 = vector.load %arg22[%c0_93, %c0_94] : memref<8x32xbf16, #tpu.memory_space<vmem>>, vector<8x32xbf16>
      tpu.vector_store %arg22[%c0_93, %c0_94], %208 {strides = array<i32>} : memref<8x32xbf16, #tpu.memory_space<vmem>>, vector<8x32xbf16>,
    } else {
    }
    %c0 = arith.constant 0 : index
    %c0_1 = arith.constant 0 : index
    %c0_2 = arith.constant 0 : index
    %3 = vector.load %arg2[%c0, %c0_1, %c0_2] : memref<1x8x32xf32, #tpu.memory_space<vmem>>, vector<1x8x32xf32>
    %4 = vector.shape_cast %3 : vector<1x8x32xf32> to vector<8x32xf32>
    %c0_3 = arith.constant 0 : index
    %c0_4 = arith.constant 0 : index
    %c0_5 = arith.constant 0 : index
    %5 = vector.load %arg2[%c0_3, %c0_4, %c0_5] : memref<1x8x32xf32, #tpu.memory_space<vmem>>, vector<1x8x32xf32>
    %6 = vector.shape_cast %5 : vector<1x8x32xf32> to vector<8x32xf32>
    %7 = arith.truncf %6 : vector<8x32xf32> to vector<8x32xbf16>
    %c0_6 = arith.constant 0 : index
    %c0_7 = arith.constant 0 : index
    %8 = vector.load %arg4[%c0_6, %c0_7] : memref<32x32xbf16, #tpu.memory_space<vmem>>, vector<32x32xbf16>
    %cst = arith.constant dense<0.000000e+00> : vector<8x32xf32>
    %9 = tpu.matmul %7, %8, %cst {dimension_numbers = #tpu.dot_dimension_numbers<[1], [0], [0], [1], [0, 0, 1, 1], [], []>} : vector<8x32xbf16>, vector<32x32xbf16>, vector<8x32xf32> -> vector<8x32xf32>
    %c0_8 = arith.constant 0 : index
    %c0_9 = arith.constant 0 : index
    %10 = vector.load %arg5[%c0_8, %c0_9] : memref<1x32xf32, #tpu.memory_space<vmem>>, vector<1x32xf32>
    %11 = vector.broadcast %10 : vector<1x32xf32> to vector<8x32xf32>
    %12 = arith.addf %9, %11 : vector<8x32xf32>
    %cst_10 = arith.constant 0.353553385 : f32
    %13 = vector.broadcast %cst_10 : f32 to vector<8x32xf32>
    %14 = arith.mulf %12, %13 : vector<8x32xf32>
    %15 = arith.truncf %14 : vector<8x32xf32> to vector<8x32xbf16>
    %c8_i32 = arith.constant 8 : i32
    %16 = arith.muli %arg1, %c8_i32 : i32
    %17 = tpu.iota {dimensions = array<i32: 0>} : vector<8x8xi32>
    %18 = vector.broadcast %16 : i32 to vector<8x8xi32>
    %19 = arith.addi %18, %17 : vector<8x8xi32>
    %20 = tpu.iota {dimensions = array<i32: 1>} : vector<8x8xi32>
    %21 = arith.cmpi sle, %20, %19 : vector<8x8xi32>
    %c0_11 = arith.constant 0 : index
    %c0_12 = arith.constant 0 : index
    %22 = vector.load %arg21[%c0_11, %c0_12] : memref<8x32xbf16, #tpu.memory_space<vmem>>, vector<8x32xbf16>
    %c0_13 = arith.constant 0 : index
    %c0_14 = arith.constant 0 : index
    %23 = vector.load %arg22[%c0_13, %c0_14] : memref<8x32xbf16, #tpu.memory_space<vmem>>, vector<8x32xbf16>
    %c0_15 = arith.constant 0 : index
    %c0_16 = arith.constant 0 : index
    %24 = vector.load %arg10[%c0_15, %c0_16] : memref<32x32xbf16, #tpu.memory_space<vmem>>, vector<32x32xbf16>
    %25 = vector.extract_strided_slice %15 {offsets = [0, 0], sizes = [8, 8], strides = [1, 1]} : vector<8x32xbf16> to vector<8x8xbf16>
    %26 = vector.extract_strided_slice %22 {offsets = [0, 0], sizes = [8, 8], strides = [1, 1]} : vector<8x32xbf16> to vector<8x8xbf16>
    %cst_17 = arith.constant dense<0.000000e+00> : vector<8x8xf32>
    %27 = tpu.matmul %25, %26, %cst_17 {dimension_numbers = #tpu.dot_dimension_numbers<[1], [1], [0], [0], [0, 0, 1, 0], [], []>} : vector<8x8xbf16>, vector<8x8xbf16>, vector<8x8xf32> -> vector<8x8xf32>
    %cst_18 = arith.constant -1.000000e+04 : f32
    %28 = vector.broadcast %cst_18 : f32 to vector<8x8xf32>
    %29 = arith.select %21, %27, %28 : vector<8x8xi1>, vector<8x8xf32>
    %cst_19 = arith.constant dense<0xFF800000> : vector<8xf32>
    %30 = vector.multi_reduction <maximumf>, %29, %cst_19 [1] : vector<8x8xf32> to vector<8xf32>
    %31 = vector.shape_cast %30 : vector<8xf32> to vector<8x1xf32>
    %32 = vector.broadcast %31 : vector<8x1xf32> to vector<8x8xf32>
    %33 = arith.subf %29, %32 : vector<8x8xf32>
    %34 = math.exp %33 : vector<8x8xf32>
    %cst_20 = arith.constant dense<0.000000e+00> : vector<8xf32>
    %35 = vector.multi_reduction <add>, %34, %cst_20 [1] : vector<8x8xf32> to vector<8xf32>
    %36 = vector.shape_cast %35 : vector<8xf32> to vector<8x1xf32>
    %37 = tpu.reciprocal %36 {approx = true} : vector<8x1xf32> -> vector<8x1xf32>
    %38 = vector.broadcast %37 : vector<8x1xf32> to vector<8x8xf32>
    %39 = arith.mulf %34, %38 : vector<8x8xf32>
    %40 = arith.truncf %39 : vector<8x8xf32> to vector<8x8xbf16>
    %41 = vector.extract_strided_slice %23 {offsets = [0, 0], sizes = [8, 8], strides = [1, 1]} : vector<8x32xbf16> to vector<8x8xbf16>
    %cst_21 = arith.constant dense<0.000000e+00> : vector<8x8xf32>
    %42 = tpu.matmul %40, %41, %cst_21 {dimension_numbers = #tpu.dot_dimension_numbers<[1], [0], [0], [1], [0, 0, 1, 1], [], []>} : vector<8x8xbf16>, vector<8x8xbf16>, vector<8x8xf32> -> vector<8x8xf32>
    %43 = arith.truncf %42 : vector<8x8xf32> to vector<8x8xbf16>
    %44 = vector.extract_strided_slice %24 {offsets = [0, 0], sizes = [8, 32], strides = [1, 1]} : vector<32x32xbf16> to vector<8x32xbf16>
    %cst_22 = arith.constant dense<0.000000e+00> : vector<8x32xf32>
    %45 = tpu.matmul %43, %44, %cst_22 {dimension_numbers = #tpu.dot_dimension_numbers<[1], [0], [0], [1], [0, 0, 1, 1], [], []>} : vector<8x8xbf16>, vector<8x32xbf16>, vector<8x32xf32> -> vector<8x32xf32>
    %46 = vector.extract_strided_slice %15 {offsets = [0, 8], sizes = [8, 8], strides = [1, 1]} : vector<8x32xbf16> to vector<8x8xbf16>
    %47 = vector.extract_strided_slice %22 {offsets = [0, 8], sizes = [8, 8], strides = [1, 1]} : vector<8x32xbf16> to vector<8x8xbf16>
    %cst_23 = arith.constant dense<0.000000e+00> : vector<8x8xf32>
    %48 = tpu.matmul %46, %47, %cst_23 {dimension_numbers = #tpu.dot_dimension_numbers<[1], [1], [0], [0], [0, 0, 1, 0], [], []>} : vector<8x8xbf16>, vector<8x8xbf16>, vector<8x8xf32> -> vector<8x8xf32>
    %cst_24 = arith.constant -1.000000e+04 : f32
    %49 = vector.broadcast %cst_24 : f32 to vector<8x8xf32>
    %50 = arith.select %21, %48, %49 : vector<8x8xi1>, vector<8x8xf32>
    %cst_25 = arith.constant dense<0xFF800000> : vector<8xf32>
    %51 = vector.multi_reduction <maximumf>, %50, %cst_25 [1] : vector<8x8xf32> to vector<8xf32>
    %52 = vector.shape_cast %51 : vector<8xf32> to vector<8x1xf32>
    %53 = vector.broadcast %52 : vector<8x1xf32> to vector<8x8xf32>
    %54 = arith.subf %50, %53 : vector<8x8xf32>
    %55 = math.exp %54 : vector<8x8xf32>
    %cst_26 = arith.constant dense<0.000000e+00> : vector<8xf32>
    %56 = vector.multi_reduction <add>, %55, %cst_26 [1] : vector<8x8xf32> to vector<8xf32>
    %57 = vector.shape_cast %56 : vector<8xf32> to vector<8x1xf32>
    %58 = tpu.reciprocal %57 {approx = true} : vector<8x1xf32> -> vector<8x1xf32>
    %59 = vector.broadcast %58 : vector<8x1xf32> to vector<8x8xf32>
    %60 = arith.mulf %55, %59 : vector<8x8xf32>
    %61 = arith.truncf %60 : vector<8x8xf32> to vector<8x8xbf16>
    %62 = vector.extract_strided_slice %23 {offsets = [0, 8], sizes = [8, 8], strides = [1, 1]} : vector<8x32xbf16> to vector<8x8xbf16>
    %cst_27 = arith.constant dense<0.000000e+00> : vector<8x8xf32>
    %63 = tpu.matmul %61, %62, %cst_27 {dimension_numbers = #tpu.dot_dimension_numbers<[1], [0], [0], [1], [0, 0, 1, 1], [], []>} : vector<8x8xbf16>, vector<8x8xbf16>, vector<8x8xf32> -> vector<8x8xf32>
    %64 = arith.truncf %63 : vector<8x8xf32> to vector<8x8xbf16>
    %65 = vector.extract_strided_slice %24 {offsets = [8, 0], sizes = [8, 32], strides = [1, 1]} : vector<32x32xbf16> to vector<8x32xbf16>
    %cst_28 = arith.constant dense<0.000000e+00> : vector<8x32xf32>
    %66 = tpu.matmul %64, %65, %cst_28 {dimension_numbers = #tpu.dot_dimension_numbers<[1], [0], [0], [1], [0, 0, 1, 1], [], []>} : vector<8x8xbf16>, vector<8x32xbf16>, vector<8x32xf32> -> vector<8x32xf32>
    %67 = arith.addf %45, %66 : vector<8x32xf32>
    %68 = vector.extract_strided_slice %15 {offsets = [0, 16], sizes = [8, 8], strides = [1, 1]} : vector<8x32xbf16> to vector<8x8xbf16>
    %69 = vector.extract_strided_slice %22 {offsets = [0, 16], sizes = [8, 8], strides = [1, 1]} : vector<8x32xbf16> to vector<8x8xbf16>
    %cst_29 = arith.constant dense<0.000000e+00> : vector<8x8xf32>
    %70 = tpu.matmul %68, %69, %cst_29 {dimension_numbers = #tpu.dot_dimension_numbers<[1], [1], [0], [0], [0, 0, 1, 0], [], []>} : vector<8x8xbf16>, vector<8x8xbf16>, vector<8x8xf32> -> vector<8x8xf32>
    %cst_30 = arith.constant -1.000000e+04 : f32
    %71 = vector.broadcast %cst_30 : f32 to vector<8x8xf32>
    %72 = arith.select %21, %70, %71 : vector<8x8xi1>, vector<8x8xf32>
    %cst_31 = arith.constant dense<0xFF800000> : vector<8xf32>
    %73 = vector.multi_reduction <maximumf>, %72, %cst_31 [1] : vector<8x8xf32> to vector<8xf32>
    %74 = vector.shape_cast %73 : vector<8xf32> to vector<8x1xf32>
    %75 = vector.broadcast %74 : vector<8x1xf32> to vector<8x8xf32>
    %76 = arith.subf %72, %75 : vector<8x8xf32>
    %77 = math.exp %76 : vector<8x8xf32>
    %cst_32 = arith.constant dense<0.000000e+00> : vector<8xf32>
    %78 = vector.multi_reduction <add>, %77, %cst_32 [1] : vector<8x8xf32> to vector<8xf32>
    %79 = vector.shape_cast %78 : vector<8xf32> to vector<8x1xf32>
    %80 = tpu.reciprocal %79 {approx = true} : vector<8x1xf32> -> vector<8x1xf32>
    %81 = vector.broadcast %80 : vector<8x1xf32> to vector<8x8xf32>
    %82 = arith.mulf %77, %81 : vector<8x8xf32>
    %83 = arith.truncf %82 : vector<8x8xf32> to vector<8x8xbf16>
    %84 = vector.extract_strided_slice %23 {offsets = [0, 16], sizes = [8, 8], strides = [1, 1]} : vector<8x32xbf16> to vector<8x8xbf16>
    %cst_33 = arith.constant dense<0.000000e+00> : vector<8x8xf32>
    %85 = tpu.matmul %83, %84, %cst_33 {dimension_numbers = #tpu.dot_dimension_numbers<[1], [0], [0], [1], [0, 0, 1, 1], [], []>} : vector<8x8xbf16>, vector<8x8xbf16>, vector<8x8xf32> -> vector<8x8xf32>
    %86 = arith.truncf %85 : vector<8x8xf32> to vector<8x8xbf16>
    %87 = vector.extract_strided_slice %24 {offsets = [16, 0], sizes = [8, 32], strides = [1, 1]} : vector<32x32xbf16> to vector<8x32xbf16>
    %cst_34 = arith.constant dense<0.000000e+00> : vector<8x32xf32>
    %88 = tpu.matmul %86, %87, %cst_34 {dimension_numbers = #tpu.dot_dimension_numbers<[1], [0], [0], [1], [0, 0, 1, 1], [], []>} : vector<8x8xbf16>, vector<8x32xbf16>, vector<8x32xf32> -> vector<8x32xf32>
    %89 = arith.addf %67, %88 : vector<8x32xf32>
    %90 = vector.extract_strided_slice %15 {offsets = [0, 24], sizes = [8, 8], strides = [1, 1]} : vector<8x32xbf16> to vector<8x8xbf16>
    %91 = vector.extract_strided_slice %22 {offsets = [0, 24], sizes = [8, 8], strides = [1, 1]} : vector<8x32xbf16> to vector<8x8xbf16>
    %cst_35 = arith.constant dense<0.000000e+00> : vector<8x8xf32>
    %92 = tpu.matmul %90, %91, %cst_35 {dimension_numbers = #tpu.dot_dimension_numbers<[1], [1], [0], [0], [0, 0, 1, 0], [], []>} : vector<8x8xbf16>, vector<8x8xbf16>, vector<8x8xf32> -> vector<8x8xf32>
    %cst_36 = arith.constant -1.000000e+04 : f32
    %93 = vector.broadcast %cst_36 : f32 to vector<8x8xf32>
    %94 = arith.select %21, %92, %93 : vector<8x8xi1>, vector<8x8xf32>
    %cst_37 = arith.constant dense<0xFF800000> : vector<8xf32>
    %95 = vector.multi_reduction <maximumf>, %94, %cst_37 [1] : vector<8x8xf32> to vector<8xf32>
    %96 = vector.shape_cast %95 : vector<8xf32> to vector<8x1xf32>
    %97 = vector.broadcast %96 : vector<8x1xf32> to vector<8x8xf32>
    %98 = arith.subf %94, %97 : vector<8x8xf32>
    %99 = math.exp %98 : vector<8x8xf32>
    %cst_38 = arith.constant dense<0.000000e+00> : vector<8xf32>
    %100 = vector.multi_reduction <add>, %99, %cst_38 [1] : vector<8x8xf32> to vector<8xf32>
    %101 = vector.shape_cast %100 : vector<8xf32> to vector<8x1xf32>
    %102 = tpu.reciprocal %101 {approx = true} : vector<8x1xf32> -> vector<8x1xf32>
    %103 = vector.broadcast %102 : vector<8x1xf32> to vector<8x8xf32>
    %104 = arith.mulf %99, %103 : vector<8x8xf32>
    %105 = arith.truncf %104 : vector<8x8xf32> to vector<8x8xbf16>
    %106 = vector.extract_strided_slice %23 {offsets = [0, 24], sizes = [8, 8], strides = [1, 1]} : vector<8x32xbf16> to vector<8x8xbf16>
    %cst_39 = arith.constant dense<0.000000e+00> : vector<8x8xf32>
    %107 = tpu.matmul %105, %106, %cst_39 {dimension_numbers = #tpu.dot_dimension_numbers<[1], [0], [0], [1], [0, 0, 1, 1], [], []>} : vector<8x8xbf16>, vector<8x8xbf16>, vector<8x8xf32> -> vector<8x8xf32>
    %108 = arith.truncf %107 : vector<8x8xf32> to vector<8x8xbf16>
    %109 = vector.extract_strided_slice %24 {offsets = [24, 0], sizes = [8, 32], strides = [1, 1]} : vector<32x32xbf16> to vector<8x32xbf16>
    %cst_40 = arith.constant dense<0.000000e+00> : vector<8x32xf32>
    %110 = tpu.matmul %108, %109, %cst_40 {dimension_numbers = #tpu.dot_dimension_numbers<[1], [0], [0], [1], [0, 0, 1, 1], [], []>} : vector<8x8xbf16>, vector<8x32xbf16>, vector<8x32xf32> -> vector<8x32xf32>
    %111 = arith.addf %89, %110 : vector<8x32xf32>
    %c0_41 = arith.constant 0 : index
    %c0_42 = arith.constant 0 : index
    %112 = vector.load %arg11[%c0_41, %c0_42] : memref<1x32xf32, #tpu.memory_space<vmem>>, vector<1x32xf32>
    %113 = vector.broadcast %112 : vector<1x32xf32> to vector<8x32xf32>
    %114 = arith.addf %111, %113 : vector<8x32xf32>
    %115 = arith.addf %4, %114 : vector<8x32xf32>
    %c0_43 = arith.constant 0 : index
    %c0_44 = arith.constant 0 : index
    %116 = vector.load %arg12[%c0_43, %c0_44] : memref<1x32xf32, #tpu.memory_space<vmem>>, vector<1x32xf32>
    %c0_45 = arith.constant 0 : index
    %c0_46 = arith.constant 0 : index
    %117 = vector.load %arg13[%c0_45, %c0_46] : memref<1x32xf32, #tpu.memory_space<vmem>>, vector<1x32xf32>
    %cst_47 = arith.constant dense<0.000000e+00> : vector<8xf32>
    %118 = vector.multi_reduction <add>, %115, %cst_47 [1] : vector<8x32xf32> to vector<8xf32>
    %119 = vector.shape_cast %118 : vector<8xf32> to vector<8x1xf32>
    %cst_48 = arith.constant 3.200000e+01 : f32
    %120 = vector.broadcast %cst_48 : f32 to vector<8x1xf32>
    %121 = arith.divf %119, %120 : vector<8x1xf32>
    %122 = vector.broadcast %121 : vector<8x1xf32> to vector<8x32xf32>
    %123 = arith.subf %115, %122 : vector<8x32xf32>
    %124 = arith.mulf %123, %123 : vector<8x32xf32>
    %cst_49 = arith.constant dense<0.000000e+00> : vector<8xf32>
    %125 = vector.multi_reduction <add>, %124, %cst_49 [1] : vector<8x32xf32> to vector<8xf32>
    %126 = vector.shape_cast %125 : vector<8xf32> to vector<8x1xf32>
    %cst_50 = arith.constant 3.200000e+01 : f32
    %127 = vector.broadcast %cst_50 : f32 to vector<8x1xf32>
    %128 = arith.divf %126, %127 : vector<8x1xf32>
    %129 = vector.broadcast %121 : vector<8x1xf32> to vector<8x32xf32>
    %130 = arith.subf %115, %129 : vector<8x32xf32>
    %cst_51 = arith.constant 9.99999974E-6 : f32
    %131 = vector.broadcast %cst_51 : f32 to vector<8x1xf32>
    %132 = arith.addf %128, %131 : vector<8x1xf32>
    %133 = math.rsqrt %132 : vector<8x1xf32>
    %134 = vector.broadcast %133 : vector<8x1xf32> to vector<8x32xf32>
    %135 = arith.mulf %130, %134 : vector<8x32xf32>
    %136 = vector.broadcast %116 : vector<1x32xf32> to vector<8x32xf32>
    %137 = arith.mulf %135, %136 : vector<8x32xf32>
    %138 = vector.broadcast %117 : vector<1x32xf32> to vector<8x32xf32>
    %139 = arith.addf %137, %138 : vector<8x32xf32>
    %140 = arith.truncf %139 : vector<8x32xf32> to vector<8x32xbf16>
    %c0_52 = arith.constant 0 : index
    %c0_53 = arith.constant 0 : index
    %141 = vector.load %arg14[%c0_52, %c0_53] : memref<32x128xbf16, #tpu.memory_space<vmem>>, vector<32x128xbf16>
    %cst_54 = arith.constant dense<0.000000e+00> : vector<8x128xf32>
    %142 = tpu.matmul %140, %141, %cst_54 {dimension_numbers = #tpu.dot_dimension_numbers<[1], [0], [0], [1], [0, 0, 1, 1], [], []>} : vector<8x32xbf16>, vector<32x128xbf16>, vector<8x128xf32> -> vector<8x128xf32>
    %c0_55 = arith.constant 0 : index
    %c0_56 = arith.constant 0 : index
    %143 = vector.load %arg15[%c0_55, %c0_56] : memref<1x128xf32, #tpu.memory_space<vmem>>, vector<1x128xf32>
    %144 = vector.broadcast %143 : vector<1x128xf32> to vector<8x128xf32>
    %145 = arith.addf %142, %144 : vector<8x128xf32>
    %146 = arith.truncf %145 : vector<8x128xf32> to vector<8x128xbf16>
    %cst_57 = arith.constant 5.000000e-01 : bf16
    %147 = vector.broadcast %cst_57 : bf16 to vector<8x128xbf16>
    %148 = arith.mulf %147, %146 : vector<8x128xbf16>
    %cst_58 = arith.constant 4.467770e-02 : bf16
    %149 = vector.broadcast %cst_58 : bf16 to vector<8x128xbf16>
    %150 = arith.mulf %149, %146 : vector<8x128xbf16>
    %151 = arith.mulf %150, %146 : vector<8x128xbf16>
    %152 = arith.mulf %151, %146 : vector<8x128xbf16>
    %153 = arith.addf %146, %152 : vector<8x128xbf16>
    %cst_59 = arith.constant 7.968750e-01 : bf16
    %154 = vector.broadcast %cst_59 : bf16 to vector<8x128xbf16>
    %155 = arith.mulf %154, %153 : vector<8x128xbf16>
    %156 = math.tanh %155 : vector<8x128xbf16>
    %cst_60 = arith.constant 1.000000e+00 : bf16
    %157 = vector.broadcast %cst_60 : bf16 to vector<8x128xbf16>
    %158 = arith.addf %157, %156 : vector<8x128xbf16>
    %159 = arith.mulf %148, %158 : vector<8x128xbf16>
    %c0_61 = arith.constant 0 : index
    %c0_62 = arith.constant 0 : index
    %160 = vector.load %arg16[%c0_61, %c0_62] : memref<128x32xbf16, #tpu.memory_space<vmem>>, vector<128x32xbf16>
    %cst_63 = arith.constant dense<0.000000e+00> : vector<8x32xf32>
    %161 = tpu.matmul %159, %160, %cst_63 {dimension_numbers = #tpu.dot_dimension_numbers<[1], [0], [0], [1], [0, 0, 1, 1], [], []>} : vector<8x128xbf16>, vector<128x32xbf16>, vector<8x32xf32> -> vector<8x32xf32>
    %c0_64 = arith.constant 0 : index
    %c0_65 = arith.constant 0 : index
    %162 = vector.load %arg17[%c0_64, %c0_65] : memref<1x32xf32, #tpu.memory_space<vmem>>, vector<1x32xf32>
    %163 = vector.broadcast %162 : vector<1x32xf32> to vector<8x32xf32>
    %164 = arith.addf %161, %163 : vector<8x32xf32>
    %165 = arith.addf %139, %164 : vector<8x32xf32>
    %c0_66 = arith.constant 0 : index
    %c0_67 = arith.constant 0 : index
    %166 = vector.load %arg18[%c0_66, %c0_67] : memref<1x32xf32, #tpu.memory_space<vmem>>, vector<1x32xf32>
    %c0_68 = arith.constant 0 : index
    %c0_69 = arith.constant 0 : index
    %167 = vector.load %arg19[%c0_68, %c0_69] : memref<1x32xf32, #tpu.memory_space<vmem>>, vector<1x32xf32>
    %cst_70 = arith.constant dense<0.000000e+00> : vector<8xf32>
    %168 = vector.multi_reduction <add>, %165, %cst_70 [1] : vector<8x32xf32> to vector<8xf32>
    %169 = vector.shape_cast %168 : vector<8xf32> to vector<8x1xf32>
    %cst_71 = arith.constant 3.200000e+01 : f32
    %170 = vector.broadcast %cst_71 : f32 to vector<8x1xf32>
    %171 = arith.divf %169, %170 : vector<8x1xf32>
    %172 = vector.broadcast %171 : vector<8x1xf32> to vector<8x32xf32>
    %173 = arith.subf %165, %172 : vector<8x32xf32>
    %174 = arith.mulf %173, %173 : vector<8x32xf32>
    %cst_72 = arith.constant dense<0.000000e+00> : vector<8xf32>
    %175 = vector.multi_reduction <add>, %174, %cst_72 [1] : vector<8x32xf32> to vector<8xf32>
    %176 = vector.shape_cast %175 : vector<8xf32> to vector<8x1xf32>
    %cst_73 = arith.constant 3.200000e+01 : f32
    %177 = vector.broadcast %cst_73 : f32 to vector<8x1xf32>
    %178 = arith.divf %176, %177 : vector<8x1xf32>
    %179 = vector.broadcast %171 : vector<8x1xf32> to vector<8x32xf32>
    %180 = arith.subf %165, %179 : vector<8x32xf32>
    %cst_74 = arith.constant 9.99999974E-6 : f32
    %181 = vector.broadcast %cst_74 : f32 to vector<8x1xf32>
    %182 = arith.addf %178, %181 : vector<8x1xf32>
    %183 = math.rsqrt %182 : vector<8x1xf32>
    %184 = vector.broadcast %183 : vector<8x1xf32> to vector<8x32xf32>
    %185 = arith.mulf %180, %184 : vector<8x32xf32>
    %186 = vector.broadcast %166 : vector<1x32xf32> to vector<8x32xf32>
    %187 = arith.mulf %185, %186 : vector<8x32xf32>
    %188 = vector.broadcast %167 : vector<1x32xf32> to vector<8x32xf32>
    %189 = arith.addf %187, %188 : vector<8x32xf32>
    %c0_75 = arith.constant 0 : index
    %c0_76 = arith.constant 0 : index
    %c0_77 = arith.constant 0 : index
    %190 = vector.load %arg20[%c0_75, %c0_76, %c0_77] : memref<1x8x32xf32, #tpu.memory_space<vmem>>, vector<1x8x32xf32>
    %191 = vector.shape_cast %190 : vector<1x8x32xf32> to vector<8x32xf32>
    %192 = vector.shape_cast %189 : vector<8x32xf32> to vector<1x8x32xf32>
    tpu.vector_store %arg20[%c0_75, %c0_76, %c0_77], %192 {strides = array<i32>} : memref<1x8x32xf32, #tpu.memory_space<vmem>>, vector<1x8x32xf32>,
    return
  }
  func.func @transform_0(%arg0: i32, %arg1: i32) -> (i32, i32, i32) {
    %c0_i32 = arith.constant 0 : i32
    %c0_i32_0 = arith.constant 0 : i32
    return %arg0, %arg1, %c0_i32 : i32, i32, i32
  }
  func.func @transform_1(%arg0: i32, %arg1: i32) -> (i32, i32, i32) {
    %c0_i32 = arith.constant 0 : i32
    %c0_i32_0 = arith.constant 0 : i32
    %c0_i32_1 = arith.constant 0 : i32
    return %arg0, %c0_i32, %c0_i32_0 : i32, i32, i32
  }
  func.func @transform_2(%arg0: i32, %arg1: i32) -> (i32, i32) {
    %c0_i32 = arith.constant 0 : i32
    %c0_i32_0 = arith.constant 0 : i32
    %c0_i32_1 = arith.constant 0 : i32
    return %c0_i32, %c0_i32_0 : i32, i32
  }
  func.func @transform_3(%arg0: i32, %arg1: i32) -> (i32, i32) {
    %c0_i32 = arith.constant 0 : i32
    %c0_i32_0 = arith.constant 0 : i32
    %c0_i32_1 = arith.constant 0 : i32
    return %c0_i32, %c0_i32_0 : i32, i32
  }
  func.func @transform_4(%arg0: i32, %arg1: i32) -> (i32, i32) {
    %c0_i32 = arith.constant 0 : i32
    %c0_i32_0 = arith.constant 0 : i32
    %c0_i32_1 = arith.constant 0 : i32
    return %c0_i32, %c0_i32_0 : i32, i32
  }
  func.func @transform_5(%arg0: i32, %arg1: i32) -> (i32, i32) {
    %c0_i32 = arith.constant 0 : i32
    %c0_i32_0 = arith.constant 0 : i32
    %c0_i32_1 = arith.constant 0 : i32
    return %c0_i32, %c0_i32_0 : i32, i32
  }
  func.func @transform_6(%arg0: i32, %arg1: i32) -> (i32, i32) {
    %c0_i32 = arith.constant 0 : i32
    %c0_i32_0 = arith.constant 0 : i32
    %c0_i32_1 = arith.constant 0 : i32
    return %c0_i32, %c0_i32_0 : i32, i32
  }
  func.func @transform_7(%arg0: i32, %arg1: i32) -> (i32, i32) {
    %c0_i32 = arith.constant 0 : i32
    %c0_i32_0 = arith.constant 0 : i32
    %c0_i32_1 = arith.constant 0 : i32
    return %c0_i32, %c0_i32_0 : i32, i32
  }
  func.func @transform_8(%arg0: i32, %arg1: i32) -> (i32, i32) {
    %c0_i32 = arith.constant 0 : i32
    %c0_i32_0 = arith.constant 0 : i32
    %c0_i32_1 = arith.constant 0 : i32
    return %c0_i32, %c0_i32_0 : i32, i32
  }
  func.func @transform_9(%arg0: i32, %arg1: i32) -> (i32, i32) {
    %c0_i32 = arith.constant 0 : i32
    %c0_i32_0 = arith.constant 0 : i32
    %c0_i32_1 = arith.constant 0 : i32
    return %c0_i32, %c0_i32_0 : i32, i32
  }
  func.func @transform_10(%arg0: i32, %arg1: i32) -> (i32, i32) {
    %c0_i32 = arith.constant 0 : i32
    %c0_i32_0 = arith.constant 0 : i32
    %c0_i32_1 = arith.constant 0 : i32
    return %c0_i32, %c0_i32_0 : i32, i32
  }
  func.func @transform_11(%arg0: i32, %arg1: i32) -> (i32, i32) {
    %c0_i32 = arith.constant 0 : i32
    %c0_i32_0 = arith.constant 0 : i32
    %c0_i32_1 = arith.constant 0 : i32
    return %c0_i32, %c0_i32_0 : i32, i32
  }
  func.func @transform_12(%arg0: i32, %arg1: i32) -> (i32, i32) {
    %c0_i32 = arith.constant 0 : i32
    %c0_i32_0 = arith.constant 0 : i32
    %c0_i32_1 = arith.constant 0 : i32
    return %c0_i32, %c0_i32_0 : i32, i32
  }
  func.func @transform_13(%arg0: i32, %arg1: i32) -> (i32, i32) {
    %c0_i32 = arith.constant 0 : i32
    %c0_i32_0 = arith.constant 0 : i32
    %c0_i32_1 = arith.constant 0 : i32
    return %c0_i32, %c0_i32_0 : i32, i32
  }
  func.func @transform_14(%arg0: i32, %arg1: i32) -> (i32, i32) {
    %c0_i32 = arith.constant 0 : i32
    %c0_i32_0 = arith.constant 0 : i32
    %c0_i32_1 = arith.constant 0 : i32
    return %c0_i32, %c0_i32_0 : i32, i32
  }
  func.func @transform_15(%arg0: i32, %arg1: i32) -> (i32, i32) {
    %c0_i32 = arith.constant 0 : i32
    %c0_i32_0 = arith.constant 0 : i32
    %c0_i32_1 = arith.constant 0 : i32
    return %c0_i32, %c0_i32_0 : i32, i32
  }
  func.func @transform_16(%arg0: i32, %arg1: i32) -> (i32, i32) {
    %c0_i32 = arith.constant 0 : i32
    %c0_i32_0 = arith.constant 0 : i32
    %c0_i32_1 = arith.constant 0 : i32
    return %c0_i32, %c0_i32_0 : i32, i32
  }
  func.func @transform_17(%arg0: i32, %arg1: i32) -> (i32, i32) {
    %c0_i32 = arith.constant 0 : i32
    %c0_i32_0 = arith.constant 0 : i32
    %c0_i32_1 = arith.constant 0 : i32
    return %c0_i32, %c0_i32_0 : i32, i32
  }
  func.func @transform_18(%arg0: i32, %arg1: i32) -> (i32, i32, i32) {
    %c0_i32 = arith.constant 0 : i32
    %c0_i32_0 = arith.constant 0 : i32
    return %arg0, %arg1, %c0_i32 : i32, i32, i32
  }
}

</mosaic_0001>

<llo_original>
// kernel: tpu_custom_call.1
$region0: #{tpu_custom_call.1}
  #allocation0 [shape = 'u32[]', space=smem, size = 0x4, offset = 0x4, fixed_abs, tag = 'smem constant byte address 0x4 - core index']
  #allocation1 [shape = 'u32[144,128]{1,0:T(1,128)}', space=vmem, size = 0x12000, scoped, tag = 'internal scratch']
  #allocation2 [shape = 'bf16[8,32]{1,0:T(8,128)(2,1)}', space=vmem, size = 0x800, scoped, tag = 'scratch operand']
  #allocation3 [shape = 'bf16[8,32]{1,0:T(8,128)(2,1)}', space=vmem, size = 0x800, scoped, tag = 'scratch operand']
  %s0 = inlined_call_operand.vmem [shape: f32[2,8,32], index: 0, kind: input, shape index: {}]
  %s1 = inlined_call_operand.vmem [shape: f32[2,8,32], index: 1, kind: input, shape index: {}]
  %s2 = inlined_call_operand.vmem [shape: bf16[32,32], index: 2, kind: input, shape index: {}]
  %s3 = inlined_call_operand.vmem [shape: f32[1,32], index: 3, kind: input, shape index: {}]
  %s4 = inlined_call_operand.vmem [shape: bf16[32,32], index: 4, kind: input, shape index: {}]
  %s5 = inlined_call_operand.vmem [shape: f32[1,32], index: 5, kind: input, shape index: {}]
  %s6 = inlined_call_operand.vmem [shape: bf16[32,32], index: 6, kind: input, shape index: {}]
  %s7 = inlined_call_operand.vmem [shape: f32[1,32], index: 7, kind: input, shape index: {}]
  %s8 = inlined_call_operand.hbm [shape: bf16[32,32], index: 8, kind: input, shape index: {}]
  %s9 = inlined_call_operand.vmem [shape: f32[1,32], index: 9, kind: input, shape index: {}]
  %s10 = inlined_call_operand.vmem [shape: f32[1,32], index: 10, kind: input, shape index: {}]
  %s11 = inlined_call_operand.vmem [shape: f32[1,32], index: 11, kind: input, shape index: {}]
  %s12 = inlined_call_operand.hbm [shape: bf16[32,128], index: 12, kind: input, shape index: {}]
  %s13 = inlined_call_operand.vmem [shape: f32[1,128], index: 13, kind: input, shape index: {}]
  %s14 = inlined_call_operand.vmem [shape: bf16[128,32], index: 14, kind: input, shape index: {}]
  %s15 = inlined_call_operand.vmem [shape: f32[1,32], index: 15, kind: input, shape index: {}]
  %s16 = inlined_call_operand.vmem [shape: f32[1,32], index: 16, kind: input, shape index: {}]
  %s17 = inlined_call_operand.vmem [shape: f32[1,32], index: 17, kind: input, shape index: {}]
  %s18 = inlined_call_operand.hbm [shape: f32[2,8,32], index: 18, kind: output, shape index: {}]
  %s19 = sld [smem:[#allocation0]]
  $region117: #{tpu_custom_call.1} parent=0
    _
  %s21 = ssub.s32 1, %s19
  %s22 = scalar_select 0, %s21, %s19
  $region1: #{tpu_custom_call.1} parent=0
    #allocation4 [shape = 'u8[8192]{0}', space=vmem, size = 0x2000, scoped, tag = 'input window, operand 8, single buffered']
    #allocation5 [shape = 's32[2]{0}', space=sflag, size = 0x8, scoped, tag = 'scoped memory for tpu_custom_call.1']
    #allocation6 [shape = 's32[2]{0}', space=sflag, size = 0x8, scoped, tag = 'scoped memory for tpu_custom_call.1']
    #allocation7 [shape = 'u8[8192]{0}', space=vmem, size = 0x2000, scoped, tag = 'input window, operand 12, single buffered']
    #allocation8 [shape = 's32[1]{0}', space=sflag, size = 0x4, scoped, tag = 'scoped memory for tpu_custom_call.1']
    #allocation9 [shape = 'u8[8192]{0}', space=vmem, size = 0x2000, scoped, tag = 'output window, operand 0']
    %23 = vsyncpa [#allocation5], 0
    %24 = vsyncpa [#allocation8], 0
    %25 = vsyncpa [#allocation6], 0
    %s26 = scalar_lea.sflag [#allocation6], 1
    %27 = vsyncpa %s26, 0
    loop: start=0, step=1, limit=4
    $region2: #{tpu_custom_call.1} parent=1 // loop_pre_header
      _
    $region3: #{tpu_custom_call.1} parent=1 // loop_header
      %s29 = sphi 0, %s33
      %p30 = scmp.ge.s32.totalorder %s29, 4
      %s36 = sphi 0, %s48
      %s37 = sphi 0, %s44
      %s38 = sphi 0, %s36
      %s39 = sphi 0, %s37
      %s40 = sphi 0, %s38
      %s41 = sphi 0, %s39
      %s53 = sphi 0, %s55
      %s56 = sphi 0, %s53
      %s57 = sphi 0, %s56
      %s73 = sphi 0, %s57
      %s79 = sphi 0, %s81
      %s82 = sphi 0, %s79
      %s83 = sphi 0, %s82
      %s99 = sphi 0, %s83
      %s103 = sphi 0, %s103
      %s105 = sphi 0, %s103
      %s106 = sphi 0, %s105
      %s120 = sphi 0, %s106
      %s124 = sphi 0, %s124
      %s126 = sphi 0, %s124
      %s127 = sphi 0, %s126
      %s141 = sphi 0, %s127
      %s145 = sphi 0, %s145
      %s147 = sphi 0, %s145
      %s148 = sphi 0, %s147
      %s162 = sphi 0, %s148
      %s166 = sphi 0, %s166
      %s168 = sphi 0, %s166
      %s169 = sphi 0, %s168
      %s183 = sphi 0, %s169
      %s187 = sphi 0, %s187
      %s189 = sphi 0, %s187
      %s190 = sphi 0, %s189
      %s204 = sphi 0, %s190
      %s208 = sphi 0, %s208
      %s210 = sphi 0, %s208
      %s211 = sphi 0, %s210
      %s225 = sphi 0, %s211
      %s229 = sphi 0, %s229
      %s231 = sphi 0, %s229
      %s232 = sphi 0, %s231
      %s246 = sphi 0, %s232
      %s250 = sphi 0, %s250
      %s252 = sphi 0, %s250
      %s253 = sphi 0, %s252
      %s267 = sphi 0, %s253
      %s271 = sphi 0, %s271
      %s273 = sphi 0, %s271
      %s274 = sphi 0, %s273
      %s288 = sphi 0, %s274
      %s292 = sphi 0, %s292
      %s294 = sphi 0, %s292
      %s295 = sphi 0, %s294
      %s309 = sphi 0, %s295
      %s313 = sphi 0, %s313
      %s315 = sphi 0, %s313
      %s316 = sphi 0, %s315
      %s330 = sphi 0, %s316
      %s334 = sphi 0, %s334
      %s336 = sphi 0, %s334
      %s337 = sphi 0, %s336
      %s351 = sphi 0, %s337
      %s355 = sphi 0, %s355
      %s357 = sphi 0, %s355
      %s358 = sphi 0, %s357
      %s372 = sphi 0, %s358
      %s376 = sphi 0, %s376
      %s378 = sphi 0, %s376
      %s379 = sphi 0, %s378
      %s393 = sphi 0, %s379
      %s397 = sphi 0, %s397
      %s399 = sphi 0, %s397
      %s400 = sphi 0, %s399
      %s414 = sphi 0, %s400
      %s418 = sphi 0, %s418
      %s420 = sphi 0, %s418
      %s421 = sphi 0, %s420
      %s435 = sphi 0, %s421
      %s443 = sphi 0, %s445
      %s446 = sphi 0, %s443
      %s447 = sphi 0, %s446
      %s463 = sphi 0, %s447
    $region4: #{tpu_custom_call.1} parent=1 // loop_header_branch
      %32 = sbr.rel (%p30) target = $region8
    $region5: #{tpu_custom_call.1} parent=1 // loop_body
      %s34 = ssub.s32 %s29, 1
      %s35 = ssub.s32 %s29, 2
      %s42 = sadd.s32 1, %s37
      %p43 = scmp.ge.s32.totalorder %s42, 1
      %s44 = scalar_select %p43, 0, %s42
      %s45 = sadd.s32 1, %s36
      %s46 = scalar_select %p43, %s45, %s36
      %p47 = scmp.ge.s32.totalorder %s46, 2
      %s48 = scalar_select %p47, 0, %s46
      %s49 = ssub.s32 %s36, %s48
      %s50 = ssub.s32 %s37, %s44
      %s51 = sor.u32 %s49, %s50
      %p52 = scmp.eq.s32.totalorder %s51, 0
      %s54 = sadd.s32 %s53, 1
      %s55 = scalar_select %p52, %s53, %s54
      %p58 = pneg %p52
      %p59 = scmp.eq.s32.totalorder %s29, 1
      %p60 = por %p58, %p59
      %p61 = scmp.ne.s32.totalorder %s53, %s56
      %p62 = scmp.eq.s32.totalorder %s29, 0
      %p63 = por %p61, %p62
      %p64 = scmp.ne.s32.totalorder %s53, %s56
      %p65 = scmp.eq.s32.totalorder %s34, 1
      %p66 = por %p64, %p65
      %p67 = scmp.ne.s32.totalorder %s56, %s57
      %p68 = scmp.eq.s32.totalorder %s34, 0
      %p69 = por %p67, %p68
      %p70 = scmp.ne.s32.totalorder %s56, %s57
      %p71 = scmp.eq.s32.totalorder %s35, 1
      %p72 = por %p70, %p71
      %p74 = scmp.ne.s32.totalorder %s57, %s73
      %p75 = scmp.eq.s32.totalorder %s35, 0
      %p76 = por %p74, %p75
      %s77 = ssub.s32 %s36, %s48
      %p78 = scmp.eq.s32.totalorder %s77, 0
      %s80 = sadd.s32 %s79, 1
      %s81 = scalar_select %p78, %s79, %s80
      %p84 = pneg %p78
      %p85 = scmp.eq.s32.totalorder %s29, 1
      %p86 = por %p84, %p85
      %p87 = scmp.ne.s32.totalorder %s79, %s82
      %p88 = scmp.eq.s32.totalorder %s29, 0
      %p89 = por %p87, %p88
      %p90 = scmp.ne.s32.totalorder %s79, %s82
      %p91 = scmp.eq.s32.totalorder %s34, 1
      %p92 = por %p90, %p91
      %p93 = scmp.ne.s32.totalorder %s82, %s83
      %p94 = scmp.eq.s32.totalorder %s34, 0
      %p95 = por %p93, %p94
      %p96 = scmp.ne.s32.totalorder %s82, %s83
      %p97 = scmp.eq.s32.totalorder %s35, 1
      %p98 = por %p96, %p97
      %p100 = scmp.ne.s32.totalorder %s83, %s99
      %p101 = scmp.eq.s32.totalorder %s35, 0
      %p102 = por %p100, %p101
      %s104 = sadd.s32 %s103, 1
      %p107 = scmp.eq.s32.totalorder %s29, 1
      %p108 = scmp.ne.s32.totalorder %s103, %s105
      %p109 = scmp.eq.s32.totalorder %s29, 0
      %p110 = por %p108, %p109
      %p111 = scmp.ne.s32.totalorder %s103, %s105
      %p112 = scmp.eq.s32.totalorder %s34, 1
      %p113 = por %p111, %p112
      %p114 = scmp.ne.s32.totalorder %s105, %s106
      %p115 = scmp.eq.s32.totalorder %s34, 0
      %p116 = por %p114, %p115
      %p117 = scmp.ne.s32.totalorder %s105, %s106
      %p118 = scmp.eq.s32.totalorder %s35, 1
      %p119 = por %p117, %p118
      %p121 = scmp.ne.s32.totalorder %s106, %s120
      %p122 = scmp.eq.s32.totalorder %s35, 0
      %p123 = por %p121, %p122
      %s125 = sadd.s32 %s124, 1
      %p128 = scmp.eq.s32.totalorder %s29, 1
      %p129 = scmp.ne.s32.totalorder %s124, %s126
      %p130 = scmp.eq.s32.totalorder %s29, 0
      %p131 = por %p129, %p130
      %p132 = scmp.ne.s32.totalorder %s124, %s126
      %p133 = scmp.eq.s32.totalorder %s34, 1
      %p134 = por %p132, %p133
      %p135 = scmp.ne.s32.totalorder %s126, %s127
      %p136 = scmp.eq.s32.totalorder %s34, 0
      %p137 = por %p135, %p136
      %p138 = scmp.ne.s32.totalorder %s126, %s127
      %p139 = scmp.eq.s32.totalorder %s35, 1
      %p140 = por %p138, %p139
      %p142 = scmp.ne.s32.totalorder %s127, %s141
      %p143 = scmp.eq.s32.totalorder %s35, 0
      %p144 = por %p142, %p143
      %s146 = sadd.s32 %s145, 1
      %p149 = scmp.eq.s32.totalorder %s29, 1
      %p150 = scmp.ne.s32.totalorder %s145, %s147
      %p151 = scmp.eq.s32.totalorder %s29, 0
      %p152 = por %p150, %p151
      %p153 = scmp.ne.s32.totalorder %s145, %s147
      %p154 = scmp.eq.s32.totalorder %s34, 1
      %p155 = por %p153, %p154
      %p156 = scmp.ne.s32.totalorder %s147, %s148
      %p157 = scmp.eq.s32.totalorder %s34, 0
      %p158 = por %p156, %p157
      %p159 = scmp.ne.s32.totalorder %s147, %s148
      %p160 = scmp.eq.s32.totalorder %s35, 1
      %p161 = por %p159, %p160
      %p163 = scmp.ne.s32.totalorder %s148, %s162
      %p164 = scmp.eq.s32.totalorder %s35, 0
      %p165 = por %p163, %p164
      %s167 = sadd.s32 %s166, 1
      %p170 = scmp.eq.s32.totalorder %s29, 1
      %p171 = scmp.ne.s32.totalorder %s166, %s168
      %p172 = scmp.eq.s32.totalorder %s29, 0
      %p173 = por %p171, %p172
      %p174 = scmp.ne.s32.totalorder %s166, %s168
      %p175 = scmp.eq.s32.totalorder %s34, 1
      %p176 = por %p174, %p175
      %p177 = scmp.ne.s32.totalorder %s168, %s169
      %p178 = scmp.eq.s32.totalorder %s34, 0
      %p179 = por %p177, %p178
      %p180 = scmp.ne.s32.totalorder %s168, %s169
      %p181 = scmp.eq.s32.totalorder %s35, 1
      %p182 = por %p180, %p181
      %p184 = scmp.ne.s32.totalorder %s169, %s183
      %p185 = scmp.eq.s32.totalorder %s35, 0
      %p186 = por %p184, %p185
      %s188 = sadd.s32 %s187, 1
      %p191 = scmp.eq.s32.totalorder %s29, 1
      %p192 = scmp.ne.s32.totalorder %s187, %s189
      %p193 = scmp.eq.s32.totalorder %s29, 0
      %p194 = por %p192, %p193
      %p195 = scmp.ne.s32.totalorder %s187, %s189
      %p196 = scmp.eq.s32.totalorder %s34, 1
      %p197 = por %p195, %p196
      %p198 = scmp.ne.s32.totalorder %s189, %s190
      %p199 = scmp.eq.s32.totalorder %s34, 0
      %p200 = por %p198, %p199
      %p201 = scmp.ne.s32.totalorder %s189, %s190
      %p202 = scmp.eq.s32.totalorder %s35, 1
      %p203 = por %p201, %p202
      %p205 = scmp.ne.s32.totalorder %s190, %s204
      %p206 = scmp.eq.s32.totalorder %s35, 0
      %p207 = por %p205, %p206
      %s209 = sadd.s32 %s208, 1
      %p212 = scmp.eq.s32.totalorder %s29, 1
      %p213 = scmp.ne.s32.totalorder %s208, %s210
      %p214 = scmp.eq.s32.totalorder %s29, 0
      %p215 = por %p213, %p214
      %p216 = scmp.ne.s32.totalorder %s208, %s210
      %p217 = scmp.eq.s32.totalorder %s34, 1
      %p218 = por %p216, %p217
      %p219 = scmp.ne.s32.totalorder %s210, %s211
      %p220 = scmp.eq.s32.totalorder %s34, 0
      %p221 = por %p219, %p220
      %p222 = scmp.ne.s32.totalorder %s210, %s211
      %p223 = scmp.eq.s32.totalorder %s35, 1
      %p224 = por %p222, %p223
      %p226 = scmp.ne.s32.totalorder %s211, %s225
      %p227 = scmp.eq.s32.totalorder %s35, 0
      %p228 = por %p226, %p227
      %s230 = sadd.s32 %s229, 1
      %p233 = scmp.eq.s32.totalorder %s29, 1
      %p234 = scmp.ne.s32.totalorder %s229, %s231
      %p235 = scmp.eq.s32.totalorder %s29, 0
      %p236 = por %p234, %p235
      %p237 = scmp.ne.s32.totalorder %s229, %s231
      %p238 = scmp.eq.s32.totalorder %s34, 1
      %p239 = por %p237, %p238
      %p240 = scmp.ne.s32.totalorder %s231, %s232
      %p241 = scmp.eq.s32.totalorder %s34, 0
      %p242 = por %p240, %p241
      %p243 = scmp.ne.s32.totalorder %s231, %s232
      %p244 = scmp.eq.s32.totalorder %s35, 1
      %p245 = por %p243, %p244
      %p247 = scmp.ne.s32.totalorder %s232, %s246
      %p248 = scmp.eq.s32.totalorder %s35, 0
      %p249 = por %p247, %p248
      %s251 = sadd.s32 %s250, 1
      %p254 = scmp.eq.s32.totalorder %s29, 1
      %p255 = scmp.ne.s32.totalorder %s250, %s252
      %p256 = scmp.eq.s32.totalorder %s29, 0
      %p257 = por %p255, %p256
      %p258 = scmp.ne.s32.totalorder %s250, %s252
      %p259 = scmp.eq.s32.totalorder %s34, 1
      %p260 = por %p258, %p259
      %p261 = scmp.ne.s32.totalorder %s252, %s253
      %p262 = scmp.eq.s32.totalorder %s34, 0
      %p263 = por %p261, %p262
      %p264 = scmp.ne.s32.totalorder %s252, %s253
      %p265 = scmp.eq.s32.totalorder %s35, 1
      %p266 = por %p264, %p265
      %p268 = scmp.ne.s32.totalorder %s253, %s267
      %p269 = scmp.eq.s32.totalorder %s35, 0
      %p270 = por %p268, %p269
      %s272 = sadd.s32 %s271, 1
      %p275 = scmp.eq.s32.totalorder %s29, 1
      %p276 = scmp.ne.s32.totalorder %s271, %s273
      %p277 = scmp.eq.s32.totalorder %s29, 0
      %p278 = por %p276, %p277
      %p279 = scmp.ne.s32.totalorder %s271, %s273
      %p280 = scmp.eq.s32.totalorder %s34, 1
      %p281 = por %p279, %p280
      %p282 = scmp.ne.s32.totalorder %s273, %s274
      %p283 = scmp.eq.s32.totalorder %s34, 0
      %p284 = por %p282, %p283
      %p285 = scmp.ne.s32.totalorder %s273, %s274
      %p286 = scmp.eq.s32.totalorder %s35, 1
      %p287 = por %p285, %p286
      %p289 = scmp.ne.s32.totalorder %s274, %s288
      %p290 = scmp.eq.s32.totalorder %s35, 0
      %p291 = por %p289, %p290
      %s293 = sadd.s32 %s292, 1
      %p296 = scmp.eq.s32.totalorder %s29, 1
      %p297 = scmp.ne.s32.totalorder %s292, %s294
      %p298 = scmp.eq.s32.totalorder %s29, 0
      %p299 = por %p297, %p298
      %p300 = scmp.ne.s32.totalorder %s292, %s294
      %p301 = scmp.eq.s32.totalorder %s34, 1
      %p302 = por %p300, %p301
      %p303 = scmp.ne.s32.totalorder %s294, %s295
      %p304 = scmp.eq.s32.totalorder %s34, 0
      %p305 = por %p303, %p304
      %p306 = scmp.ne.s32.totalorder %s294, %s295
      %p307 = scmp.eq.s32.totalorder %s35, 1
      %p308 = por %p306, %p307
      %p310 = scmp.ne.s32.totalorder %s295, %s309
      %p311 = scmp.eq.s32.totalorder %s35, 0
      %p312 = por %p310, %p311
      %s314 = sadd.s32 %s313, 1
      %p317 = scmp.eq.s32.totalorder %s29, 1
      %p318 = scmp.ne.s32.totalorder %s313, %s315
      %p319 = scmp.eq.s32.totalorder %s29, 0
      %p320 = por %p318, %p319
      %p321 = scmp.ne.s32.totalorder %s313, %s315
      %p322 = scmp.eq.s32.totalorder %s34, 1
      %p323 = por %p321, %p322
      %p324 = scmp.ne.s32.totalorder %s315, %s316
      %p325 = scmp.eq.s32.totalorder %s34, 0
      %p326 = por %p324, %p325
      %p327 = scmp.ne.s32.totalorder %s315, %s316
      %p328 = scmp.eq.s32.totalorder %s35, 1
      %p329 = por %p327, %p328
      %p331 = scmp.ne.s32.totalorder %s316, %s330
      %p332 = scmp.eq.s32.totalorder %s35, 0
      %p333 = por %p331, %p332
      %s335 = sadd.s32 %s334, 1
      %p338 = scmp.eq.s32.totalorder %s29, 1
      %p339 = scmp.ne.s32.totalorder %s334, %s336
      %p340 = scmp.eq.s32.totalorder %s29, 0
      %p341 = por %p339, %p340
      %p342 = scmp.ne.s32.totalorder %s334, %s336
      %p343 = scmp.eq.s32.totalorder %s34, 1
      %p344 = por %p342, %p343
      %p345 = scmp.ne.s32.totalorder %s336, %s337
      %p346 = scmp.eq.s32.totalorder %s34, 0
      %p347 = por %p345, %p346
      %p348 = scmp.ne.s32.totalorder %s336, %s337
      %p349 = scmp.eq.s32.totalorder %s35, 1
      %p350 = por %p348, %p349
      %p352 = scmp.ne.s32.totalorder %s337, %s351
      %p353 = scmp.eq.s32.totalorder %s35, 0
      %p354 = por %p352, %p353
      %s356 = sadd.s32 %s355, 1
      %p359 = scmp.eq.s32.totalorder %s29, 1
      %p360 = scmp.ne.s32.totalorder %s355, %s357
      %p361 = scmp.eq.s32.totalorder %s29, 0
      %p362 = por %p360, %p361
      %p363 = scmp.ne.s32.totalorder %s355, %s357
      %p364 = scmp.eq.s32.totalorder %s34, 1
      %p365 = por %p363, %p364
      %p366 = scmp.ne.s32.totalorder %s357, %s358
      %p367 = scmp.eq.s32.totalorder %s34, 0
      %p368 = por %p366, %p367
      %p369 = scmp.ne.s32.totalorder %s357, %s358
      %p370 = scmp.eq.s32.totalorder %s35, 1
      %p371 = por %p369, %p370
      %p373 = scmp.ne.s32.totalorder %s358, %s372
      %p374 = scmp.eq.s32.totalorder %s35, 0
      %p375 = por %p373, %p374
      %s377 = sadd.s32 %s376, 1
      %p380 = scmp.eq.s32.totalorder %s29, 1
      %p381 = scmp.ne.s32.totalorder %s376, %s378
      %p382 = scmp.eq.s32.totalorder %s29, 0
      %p383 = por %p381, %p382
      %p384 = scmp.ne.s32.totalorder %s376, %s378
      %p385 = scmp.eq.s32.totalorder %s34, 1
      %p386 = por %p384, %p385
      %p387 = scmp.ne.s32.totalorder %s378, %s379
      %p388 = scmp.eq.s32.totalorder %s34, 0
      %p389 = por %p387, %p388
      %p390 = scmp.ne.s32.totalorder %s378, %s379
      %p391 = scmp.eq.s32.totalorder %s35, 1
      %p392 = por %p390, %p391
      %p394 = scmp.ne.s32.totalorder %s379, %s393
      %p395 = scmp.eq.s32.totalorder %s35, 0
      %p396 = por %p394, %p395
      %s398 = sadd.s32 %s397, 1
      %p401 = scmp.eq.s32.totalorder %s29, 1
      %p402 = scmp.ne.s32.totalorder %s397, %s399
      %p403 = scmp.eq.s32.totalorder %s29, 0
      %p404 = por %p402, %p403
      %p405 = scmp.ne.s32.totalorder %s397, %s399
      %p406 = scmp.eq.s32.totalorder %s34, 1
      %p407 = por %p405, %p406
      %p408 = scmp.ne.s32.totalorder %s399, %s400
      %p409 = scmp.eq.s32.totalorder %s34, 0
      %p410 = por %p408, %p409
      %p411 = scmp.ne.s32.totalorder %s399, %s400
      %p412 = scmp.eq.s32.totalorder %s35, 1
      %p413 = por %p411, %p412
      %p415 = scmp.ne.s32.totalorder %s400, %s414
      %p416 = scmp.eq.s32.totalorder %s35, 0
      %p417 = por %p415, %p416
      %s419 = sadd.s32 %s418, 1
      %p422 = scmp.eq.s32.totalorder %s29, 1
      %p423 = scmp.ne.s32.totalorder %s418, %s420
      %p424 = scmp.eq.s32.totalorder %s29, 0
      %p425 = por %p423, %p424
      %p426 = scmp.ne.s32.totalorder %s418, %s420
      %p427 = scmp.eq.s32.totalorder %s34, 1
      %p428 = por %p426, %p427
      %p429 = scmp.ne.s32.totalorder %s420, %s421
      %p430 = scmp.eq.s32.totalorder %s34, 0
      %p431 = por %p429, %p430
      %p432 = scmp.ne.s32.totalorder %s420, %s421
      %p433 = scmp.eq.s32.totalorder %s35, 1
      %p434 = por %p432, %p433
      %p436 = scmp.ne.s32.totalorder %s421, %s435
      %p437 = scmp.eq.s32.totalorder %s35, 0
      %p438 = por %p436, %p437
      %s439 = ssub.s32 %s36, %s48
      %s440 = ssub.s32 %s37, %s44
      %s441 = sor.u32 %s439, %s440
      %p442 = scmp.eq.s32.totalorder %s441, 0
      %s444 = sadd.s32 %s443, 1
      %s445 = scalar_select %p442, %s443, %s444
      %p448 = pneg %p442
      %p449 = scmp.eq.s32.totalorder %s29, 1
      %p450 = por %p448, %p449
      %p451 = scmp.ne.s32.totalorder %s443, %s446
      %p452 = scmp.eq.s32.totalorder %s29, 0
      %p453 = por %p451, %p452
      %p454 = scmp.ne.s32.totalorder %s443, %s446
      %p455 = scmp.eq.s32.totalorder %s34, 1
      %p456 = por %p454, %p455
      %p457 = scmp.ne.s32.totalorder %s446, %s447
      %p458 = scmp.eq.s32.totalorder %s34, 0
      %p459 = por %p457, %p458
      %p460 = scmp.ne.s32.totalorder %s446, %s447
      %p461 = scmp.eq.s32.totalorder %s35, 1
      %p462 = por %p460, %p461
      %p464 = scmp.ne.s32.totalorder %s447, %s463
      %p465 = scmp.eq.s32.totalorder %s35, 0
      %p466 = por %p464, %p465
      %p467 = scmp.le.s32.totalorder 1, %s29
      %p468 = scmp.lt.s32.totalorder %s29, 3
      %p469 = pnand %p467, %p468
      %p470 = pneg %p469
      // Predicated region
      $region9: #{tpu_custom_call.1} parent=5 // pred_check
        _
      $region10: #{tpu_custom_call.1} parent=5 // pred_check_branch
        %472 = sbr.rel (%p469) target = $region12
      $region11: #{tpu_custom_call.1} parent=5 // pred_region
        %s473 = ssub.s32 %s29, 1
        // Predicated region
        $region13: #{tpu_custom_call.1} parent=11 // pred_check
          %p474 = pneg %p116
        $region14: #{tpu_custom_call.1} parent=11 // pred_check_branch
          %476 = sbr.rel (%p474) target = $region16
        $region15: #{tpu_custom_call.1} parent=11 // pred_region
          _
        $region16: #{tpu_custom_call.1} parent=11 // pred_fallthru
          _
        // Predicated region
        $region17: #{tpu_custom_call.1} parent=11 // pred_check
          %p477 = pneg %p137
        $region18: #{tpu_custom_call.1} parent=11 // pred_check_branch
          %479 = sbr.rel (%p477) target = $region20
        $region19: #{tpu_custom_call.1} parent=11 // pred_region
          _
        $region20: #{tpu_custom_call.1} parent=11 // pred_fallthru
          _
        // Predicated region
        $region21: #{tpu_custom_call.1} parent=11 // pred_check
          %p480 = pneg %p158
        $region22: #{tpu_custom_call.1} parent=11 // pred_check_branch
          %482 = sbr.rel (%p480) target = $region24
        $region23: #{tpu_custom_call.1} parent=11 // pred_region
          _
        $region24: #{tpu_custom_call.1} parent=11 // pred_fallthru
          _
        // Predicated region
        $region25: #{tpu_custom_call.1} parent=11 // pred_check
          %p483 = pneg %p179
        $region26: #{tpu_custom_call.1} parent=11 // pred_check_branch
          %485 = sbr.rel (%p483) target = $region28
        $region27: #{tpu_custom_call.1} parent=11 // pred_region
          _
        $region28: #{tpu_custom_call.1} parent=11 // pred_fallthru
          _
        // Predicated region
        $region29: #{tpu_custom_call.1} parent=11 // pred_check
          %p486 = pneg %p200
        $region30: #{tpu_custom_call.1} parent=11 // pred_check_branch
          %488 = sbr.rel (%p486) target = $region32
        $region31: #{tpu_custom_call.1} parent=11 // pred_region
          _
        $region32: #{tpu_custom_call.1} parent=11 // pred_fallthru
          _
        // Predicated region
        $region33: #{tpu_custom_call.1} parent=11 // pred_check
          %p489 = pneg %p221
        $region34: #{tpu_custom_call.1} parent=11 // pred_check_branch
          %491 = sbr.rel (%p489) target = $region36
        $region35: #{tpu_custom_call.1} parent=11 // pred_region
          _
        $region36: #{tpu_custom_call.1} parent=11 // pred_fallthru
          _
        // Predicated region
        $region37: #{tpu_custom_call.1} parent=11 // pred_check
          %p492 = pneg %p242
        $region38: #{tpu_custom_call.1} parent=11 // pred_check_branch
          %494 = sbr.rel (%p492) target = $region40
        $region39: #{tpu_custom_call.1} parent=11 // pred_region
          %s496 = ssub.s32 256, 256
          %497 = vsyncadd [#allocation5], %s496
          %s498 = sshll.u32 [#allocation4], 4
          %s499 = int_to_ptr.vmem [resolvable:$true] %s498
          %504 = dma.hbm_to_vmem [thread:$0]  %s8, 256, %s499, [#allocation5], 64, 64, 4
        $region40: #{tpu_custom_call.1} parent=11 // pred_fallthru
          _
        // Predicated region
        $region41: #{tpu_custom_call.1} parent=11 // pred_check
          %p505 = pneg %p263
        $region42: #{tpu_custom_call.1} parent=11 // pred_check_branch
          %507 = sbr.rel (%p505) target = $region44
        $region43: #{tpu_custom_call.1} parent=11 // pred_region
          _
        $region44: #{tpu_custom_call.1} parent=11 // pred_fallthru
          _
        // Predicated region
        $region45: #{tpu_custom_call.1} parent=11 // pred_check
          %p508 = pneg %p284
        $region46: #{tpu_custom_call.1} parent=11 // pred_check_branch
          %510 = sbr.rel (%p508) target = $region48
        $region47: #{tpu_custom_call.1} parent=11 // pred_region
          _
        $region48: #{tpu_custom_call.1} parent=11 // pred_fallthru
          _
        // Predicated region
        $region49: #{tpu_custom_call.1} parent=11 // pred_check
          %p511 = pneg %p305
        $region50: #{tpu_custom_call.1} parent=11 // pred_check_branch
          %513 = sbr.rel (%p511) target = $region52
        $region51: #{tpu_custom_call.1} parent=11 // pred_region
          _
        $region52: #{tpu_custom_call.1} parent=11 // pred_fallthru
          _
        // Predicated region
        $region53: #{tpu_custom_call.1} parent=11 // pred_check
          %p514 = pneg %p326
        $region54: #{tpu_custom_call.1} parent=11 // pred_check_branch
          %516 = sbr.rel (%p514) target = $region56
        $region55: #{tpu_custom_call.1} parent=11 // pred_region
          %s518 = ssub.s32 256, 256
          %519 = vsyncadd [#allocation8], %s518
          %s520 = sshll.u32 [#allocation7], 4
          %s521 = int_to_ptr.vmem [resolvable:$true] %s520
          %526 = dma.hbm_to_vmem [thread:$0]  %s12, 256, %s521, [#allocation8], 64, 64, 4
        $region56: #{tpu_custom_call.1} parent=11 // pred_fallthru
          _
        // Predicated region
        $region57: #{tpu_custom_call.1} parent=11 // pred_check
          %p527 = pneg %p347
        $region58: #{tpu_custom_call.1} parent=11 // pred_check_branch
          %529 = sbr.rel (%p527) target = $region60
        $region59: #{tpu_custom_call.1} parent=11 // pred_region
          _
        $region60: #{tpu_custom_call.1} parent=11 // pred_fallthru
          _
        // Predicated region
        $region61: #{tpu_custom_call.1} parent=11 // pred_check
          %p530 = pneg %p368
        $region62: #{tpu_custom_call.1} parent=11 // pred_check_branch
          %532 = sbr.rel (%p530) target = $region64
        $region63: #{tpu_custom_call.1} parent=11 // pred_region
          _
        $region64: #{tpu_custom_call.1} parent=11 // pred_fallthru
          _
        // Predicated region
        $region65: #{tpu_custom_call.1} parent=11 // pred_check
          %p533 = pneg %p389
        $region66: #{tpu_custom_call.1} parent=11 // pred_check_branch
          %535 = sbr.rel (%p533) target = $region68
        $region67: #{tpu_custom_call.1} parent=11 // pred_region
          _
        $region68: #{tpu_custom_call.1} parent=11 // pred_fallthru
          _
        // Predicated region
        $region69: #{tpu_custom_call.1} parent=11 // pred_check
          %p536 = pneg %p410
        $region70: #{tpu_custom_call.1} parent=11 // pred_check_branch
          %538 = sbr.rel (%p536) target = $region72
        $region71: #{tpu_custom_call.1} parent=11 // pred_region
          _
        $region72: #{tpu_custom_call.1} parent=11 // pred_fallthru
          _
        // Predicated region
        $region73: #{tpu_custom_call.1} parent=11 // pred_check
          %p539 = pneg %p431
        $region74: #{tpu_custom_call.1} parent=11 // pred_check_branch
          %541 = sbr.rel (%p539) target = $region76
        $region75: #{tpu_custom_call.1} parent=11 // pred_region
          _
        $region76: #{tpu_custom_call.1} parent=11 // pred_fallthru
          _
      $region12: #{tpu_custom_call.1} parent=5 // pred_fallthru
        _
      %p542 = scmp.lt.s32.totalorder %s29, 2
      // Predicated region
      $region77: #{tpu_custom_call.1} parent=5 // pred_check
        %p543 = pneg %p542
      $region78: #{tpu_custom_call.1} parent=5 // pred_check_branch
        %545 = sbr.rel (%p543) target = $region80
      $region79: #{tpu_custom_call.1} parent=5 // pred_region
        // Predicated region
        $region81: #{tpu_custom_call.1} parent=79 // pred_check
          %p546 = pneg %p63
        $region82: #{tpu_custom_call.1} parent=79 // pred_check_branch
          %548 = sbr.rel (%p546) target = $region84
        $region83: #{tpu_custom_call.1} parent=79 // pred_region
          %p549 = scmp.lt.s32.totalorder %s36, 1
          %s550 = scalar_select %p549, %s36, 1
          %p551 = scmp.lt.s32.totalorder %s37, 0
          %s552 = scalar_select %p551, %s37, 0
          %s553 = sadd.s32 %s552, %s550
          %s554 = smul.addr %s553, 8
          %s555 = scalar_lea.vmem %s0, %s554
        $region84: #{tpu_custom_call.1} parent=79 // pred_fallthru
          _
        // Predicated region
        $region85: #{tpu_custom_call.1} parent=79 // pred_check
          %p556 = pneg %p89
        $region86: #{tpu_custom_call.1} parent=79 // pred_check_branch
          %558 = sbr.rel (%p556) target = $region88
        $region87: #{tpu_custom_call.1} parent=79 // pred_region
          %p559 = scmp.lt.s32.totalorder %s36, 1
          %s560 = scalar_select %p559, %s36, 1
          %s561 = smul.addr %s560, 8
          %s562 = scalar_lea.vmem %s1, %s561
        $region88: #{tpu_custom_call.1} parent=79 // pred_fallthru
          _
      $region80: #{tpu_custom_call.1} parent=5 // pred_fallthru
        _
      %p563 = scmp.le.s32.totalorder 1, %s29
      %p564 = scmp.lt.s32.totalorder %s29, 3
      %p565 = pnand %p563, %p564
      %p566 = pneg %p565
      // Predicated region
      $region89: #{tpu_custom_call.1} parent=5 // pred_check
        _
      $region90: #{tpu_custom_call.1} parent=5 // pred_check_branch
        %568 = sbr.rel (%p565) target = $region92
      $region91: #{tpu_custom_call.1} parent=5 // pred_region
        %s569 = ssub.s32 %s29, 1
        // Predicated region
        $region93: #{tpu_custom_call.1} parent=91 // pred_check
          %p570 = pneg %p242
        $region94: #{tpu_custom_call.1} parent=91 // pred_check_branch
          %572 = sbr.rel (%p570) target = $region96
        $region95: #{tpu_custom_call.1} parent=91 // pred_region
          %573 = dma.done [#allocation5], 256
        $region96: #{tpu_custom_call.1} parent=91 // pred_fallthru
          _
        // Predicated region
        $region97: #{tpu_custom_call.1} parent=91 // pred_check
          %p574 = pneg %p326
        $region98: #{tpu_custom_call.1} parent=91 // pred_check_branch
          %576 = sbr.rel (%p574) target = $region100
        $region99: #{tpu_custom_call.1} parent=91 // pred_region
          %577 = dma.done [#allocation8], 256
        $region100: #{tpu_custom_call.1} parent=91 // pred_fallthru
          _
        %p578 = scmp.lt.s32.totalorder %s38, 1
        %s579 = scalar_select %p578, %s38, 1
        %p580 = scmp.lt.s32.totalorder %s39, 0
        %s581 = scalar_select %p580, %s39, 0
        %s582 = sadd.s32 %s581, %s579
        %s583 = smul.addr %s582, 8
        %s584 = scalar_lea.vmem %s0, %s583
        %p585 = pneg %p69
        %p586 = pneg %p66
        %p587 = scmp.lt.s32.totalorder %s38, 1
        %s588 = scalar_select %p587, %s38, 1
        %s589 = smul.addr %s588, 8
        %s590 = scalar_lea.vmem %s1, %s589
        %p591 = pneg %p95
        %p592 = pneg %p92
        %p593 = pneg %p116
        %p594 = pneg %p113
        %p595 = pneg %p137
        %p596 = pneg %p134
        %p597 = pneg %p158
        %p598 = pneg %p155
        %p599 = pneg %p179
        %p600 = pneg %p176
        %p601 = pneg %p200
        %p602 = pneg %p197
        %p603 = pneg %p221
        %p604 = pneg %p218
        %p605 = pneg %p242
        %p606 = pneg %p239
        %p607 = pneg %p263
        %p608 = pneg %p260
        %p609 = pneg %p284
        %p610 = pneg %p281
        %p611 = pneg %p305
        %p612 = pneg %p302
        %p613 = pneg %p326
        %p614 = pneg %p323
        %p615 = pneg %p347
        %p616 = pneg %p344
        %p617 = pneg %p368
        %p618 = pneg %p365
        %p619 = pneg %p389
        %p620 = pneg %p386
        %p621 = pneg %p410
        %p622 = pneg %p407
        %p623 = pneg %p431
        %p624 = pneg %p428
        %p625 = pneg %p459
        %p626 = pneg %p456
        %s627 = sand.u32 %s446, 1
        %s628 = scalar_lea.sflag [#allocation6], %s627
        %s629 = sand.u32 %s446, 1
        %s630 = smul.addr %s629, 8
        %s631 = scalar_lea.vmem [#allocation9], %s630
        %p632 = scmp.lt.s32.totalorder %s38, 1
        %s633 = scalar_select %p632, %s38, 1
        %p634 = scmp.lt.s32.totalorder %s39, 0
        %s635 = scalar_select %p634, %s39, 0
        %s636 = sadd.s32 %s635, %s633
        %s637 = smul.addr %s636, 8
        %s638 = scalar_lea.vmem %s0, %s637
        %p639 = scmp.lt.s32.totalorder %s38, 1
        %s640 = scalar_select %p639, %s38, 1
        %s641 = smul.addr %s640, 8
        %s642 = scalar_lea.vmem %s1, %s641
        %p648 = scmp.eq.s32.totalorder %s39, 0
        // Predicated region
        $region101: #{tpu_custom_call.1} parent=91 // pred_check
          %p649 = pneg %p648
        $region102: #{tpu_custom_call.1} parent=91 // pred_check_branch
          %651 = sbr.rel (%p649) target = $region104
        $region103: #{tpu_custom_call.1} parent=91 // pred_region
          %v652 = vld [vmem:[%s642] sm:$0xff]
          %v653 = vpack.c.bf16 %v652, %v652
          %v654 = vld [vmem:[%s4] sm:$0xf]
          %v655 = vld [vmem:[%s4 + $0x4] sm:$0xf]
          %v656 = vld [vmem:[%s4 + $0x8] sm:$0xf]
          %v657 = vld [vmem:[%s4 + $0xc] sm:$0xf]
          %v658 = vld [vmem:[%s5] sm:$0x1]
          %v660 = vlaneseq
          %v661 = vshrl.u32 %v660, 7
          %v662 = vsub.s32 0, %v661
          %v663 = vrot.slane %v658, %v662
          %v669 = vunpack.c.l.b16 %v654
          %v670 = vunpack.c.l.b16 %v655
          %v671 = vunpack.c.l.b16 %v656
          %v672 = vunpack.c.l.b16 %v657
          %v673 = vpack.c.b16 %v670, %v669
          %v674 = vpack.c.b16 %v672, %v671
          %vm677 = vcmask 261120
          %v679 = vsel %vm677, %v653, 0
          %681 = vmatprep.subr.bf16.mxu0 0
          %682 = vmatpush1.bf16.msra.mxu0 0
          %683 = vmatprep.subr.bf16.mxu0 0
          %684 = vmatpush1.bf16.msra.mxu0 0
          %685 = vmatprep.subr.bf16.mxu0 0
          %686 = vmatpush1.bf16.msra.mxu0 0
          %687 = vmatprep.subr.bf16.mxu0 0
          %688 = vmatpush1.bf16.msra.mxu0 0
          %689 = vmatprep.subr.bf16.mxu0 0
          %690 = vmatpush1.bf16.msra.mxu0 0
          %691 = vmatprep.subr.bf16.mxu0 0
          %692 = vmatpush1.bf16.msra.mxu0 0
          %693 = vmatprep.subr.bf16.mxu0 0
          %694 = vmatpush1.bf16.msra.mxu0 %v674
          %695 = vmatprep.subr.bf16.mxu0 0
          %696 = vmatpush1.bf16.msra.mxu0 %v673
          %697 = vmatprep.subr.bf16.mxu0 0
          %698 = vmatpush2.bf16.msra.mxu0 0
          %699 = vmatprep.subr.bf16.mxu0 0
          %700 = vmatpush2.bf16.msra.mxu0 0
          %701 = vmatprep.subr.bf16.mxu0 0
          %702 = vmatpush2.bf16.msra.mxu0 0
          %703 = vmatprep.subr.bf16.mxu0 0
          %704 = vmatpush2.bf16.msra.mxu0 0
          %705 = vmatprep.subr.bf16.mxu0 0
          %706 = vmatpush2.bf16.msra.mxu0 0
          %707 = vmatprep.subr.bf16.mxu0 0
          %708 = vmatpush2.bf16.msra.mxu0 0
          %709 = vmatprep.subr.bf16.mxu0 0
          %710 = vmatpush2.bf16.msra.mxu0 0
          %711 = vmatprep.subr.bf16.mxu0 0
          %712 = vmatpush2.bf16.msra.mxu0 0
          %713 = vmatprep.mubr.bf16.mxu0 0
          %714 = vmatmul.mubr.bf16.gmra.mxu0 %v679
          %v715 = vpop.f32.mrf.mxu0
          %v716 = vadd.f32 %v663, %v715
          %v717 = vpop.f32.mrf.mxu0
          %v718 = vpop.f32.mrf.mxu0
          %v719 = vpop.f32.mrf.mxu0
          %720 = vdwg.mxu0
          %v721 = vld [vmem:[%s6] sm:$0xf]
          %v722 = vld [vmem:[%s6 + $0x4] sm:$0xf]
          %v723 = vld [vmem:[%s6 + $0x8] sm:$0xf]
          %v724 = vld [vmem:[%s6 + $0xc] sm:$0xf]
          %v725 = vld [vmem:[%s7] sm:$0x1]
          %v727 = vlaneseq
          %v728 = vshrl.u32 %v727, 7
          %v729 = vsub.s32 0, %v728
          %v730 = vrot.slane %v725, %v729
          %v736 = vunpack.c.l.b16 %v721
          %v737 = vunpack.c.l.b16 %v722
          %v738 = vunpack.c.l.b16 %v723
          %v739 = vunpack.c.l.b16 %v724
          %v740 = vpack.c.b16 %v737, %v736
          %v741 = vpack.c.b16 %v739, %v738
          %744 = vmatprep.subr.bf16.mxu0 0
          %745 = vmatpush1.bf16.msra.mxu0 0
          %746 = vmatprep.subr.bf16.mxu0 0
          %747 = vmatpush1.bf16.msra.mxu0 0
          %748 = vmatprep.subr.bf16.mxu0 0
          %749 = vmatpush1.bf16.msra.mxu0 0
          %750 = vmatprep.subr.bf16.mxu0 0
          %751 = vmatpush1.bf16.msra.mxu0 0
          %752 = vmatprep.subr.bf16.mxu0 0
          %753 = vmatpush1.bf16.msra.mxu0 0
          %754 = vmatprep.subr.bf16.mxu0 0
          %755 = vmatpush1.bf16.msra.mxu0 0
          %756 = vmatprep.subr.bf16.mxu0 0
          %757 = vmatpush1.bf16.msra.mxu0 %v741
          %758 = vmatprep.subr.bf16.mxu0 0
          %759 = vmatpush1.bf16.msra.mxu0 %v740
          %760 = vmatprep.subr.bf16.mxu0 0
          %761 = vmatpush2.bf16.msra.mxu0 0
          %762 = vmatprep.subr.bf16.mxu0 0
          %763 = vmatpush2.bf16.msra.mxu0 0
          %764 = vmatprep.subr.bf16.mxu0 0
          %765 = vmatpush2.bf16.msra.mxu0 0
          %766 = vmatprep.subr.bf16.mxu0 0
          %767 = vmatpush2.bf16.msra.mxu0 0
          %768 = vmatprep.subr.bf16.mxu0 0
          %769 = vmatpush2.bf16.msra.mxu0 0
          %770 = vmatprep.subr.bf16.mxu0 0
          %771 = vmatpush2.bf16.msra.mxu0 0
          %772 = vmatprep.subr.bf16.mxu0 0
          %773 = vmatpush2.bf16.msra.mxu0 0
          %774 = vmatprep.subr.bf16.mxu0 0
          %775 = vmatpush2.bf16.msra.mxu0 0
          %776 = vmatprep.mubr.bf16.mxu0 0
          %777 = vmatmul.mubr.bf16.gmra.mxu0 %v679
          %v778 = vpop.f32.mrf.mxu0
          %v779 = vadd.f32 %v730, %v778
          %v780 = vpop.f32.mrf.mxu0
          %v781 = vpop.f32.mrf.mxu0
          %v782 = vpop.f32.mrf.mxu0
          %783 = vdwg.mxu0
          %v784 = vpack.c.bf16 %v716, %v716
          %vm785 = vcmask 257024
          %786 = vst.msk [vmem:[#allocation2] sm:$0xf] %vm785, %v784
          %v787 = vpack.c.bf16 %v779, %v779
          %788 = vst.msk [vmem:[#allocation3] sm:$0xf] %vm785, %v787
        $region104: #{tpu_custom_call.1} parent=91 // pred_fallthru
          _
        %v789 = vld [vmem:[%s638] sm:$0xff]
        %v790 = vpack.c.bf16 %v789, %v789
        %v791 = vld [vmem:[%s2] sm:$0xf]
        %v792 = vld [vmem:[%s2 + $0x4] sm:$0xf]
        %v793 = vld [vmem:[%s2 + $0x8] sm:$0xf]
        %v794 = vld [vmem:[%s2 + $0xc] sm:$0xf]
        %v795 = vld [vmem:[%s3] sm:$0x1]
        %v797 = vlaneseq
        %v798 = vshrl.u32 %v797, 7
        %v799 = vsub.s32 0, %v798
        %v800 = vrot.slane %v795, %v799
        %v806 = vunpack.c.l.b16 %v791
        %v807 = vunpack.c.l.b16 %v792
        %v808 = vunpack.c.l.b16 %v793
        %v809 = vunpack.c.l.b16 %v794
        %v810 = vpack.c.b16 %v807, %v806
        %v811 = vpack.c.b16 %v809, %v808
        %vm814 = vcmask 261120
        %v816 = vsel %vm814, %v790, 0
        %818 = vmatprep.subr.bf16.mxu0 0
        %819 = vmatpush1.bf16.msra.mxu0 0
        %820 = vmatprep.subr.bf16.mxu0 0
        %821 = vmatpush1.bf16.msra.mxu0 0
        %822 = vmatprep.subr.bf16.mxu0 0
        %823 = vmatpush1.bf16.msra.mxu0 0
        %824 = vmatprep.subr.bf16.mxu0 0
        %825 = vmatpush1.bf16.msra.mxu0 0
        %826 = vmatprep.subr.bf16.mxu0 0
        %827 = vmatpush1.bf16.msra.mxu0 0
        %828 = vmatprep.subr.bf16.mxu0 0
        %829 = vmatpush1.bf16.msra.mxu0 0
        %830 = vmatprep.subr.bf16.mxu0 0
        %831 = vmatpush1.bf16.msra.mxu0 %v811
        %832 = vmatprep.subr.bf16.mxu0 0
        %833 = vmatpush1.bf16.msra.mxu0 %v810
        %834 = vmatprep.subr.bf16.mxu0 0
        %835 = vmatpush2.bf16.msra.mxu0 0
        %836 = vmatprep.subr.bf16.mxu0 0
        %837 = vmatpush2.bf16.msra.mxu0 0
        %838 = vmatprep.subr.bf16.mxu0 0
        %839 = vmatpush2.bf16.msra.mxu0 0
        %840 = vmatprep.subr.bf16.mxu0 0
        %841 = vmatpush2.bf16.msra.mxu0 0
        %842 = vmatprep.subr.bf16.mxu0 0
        %843 = vmatpush2.bf16.msra.mxu0 0
        %844 = vmatprep.subr.bf16.mxu0 0
        %845 = vmatpush2.bf16.msra.mxu0 0
        %846 = vmatprep.subr.bf16.mxu0 0
        %847 = vmatpush2.bf16.msra.mxu0 0
        %848 = vmatprep.subr.bf16.mxu0 0
        %849 = vmatpush2.bf16.msra.mxu0 0
        %850 = vmatprep.mubr.bf16.mxu0 0
        %851 = vmatmul.mubr.bf16.gmra.mxu0 %v816
        %v852 = vpop.f32.mrf.mxu0
        %v853 = vadd.f32 %v800, %v852
        %v854 = vpop.f32.mrf.mxu0
        %v855 = vpop.f32.mrf.mxu0
        %v856 = vpop.f32.mrf.mxu0
        %857 = vdwg.mxu0
        %v858 = vmul.f32 %v853, 0.35355338
        %v859 = vpack.c.bf16 %v858, %v858
        %s860 = smul.u32 %s39, 8
        %v861 = vlaneseq
        %v862 = vshrl.u32 %v861, 7
        %v863 = vstv %s860
        %v864 = vadd.s32 %v863, %v862
        %v865 = vlaneseq
        %v866 = vand.u32 %v865, 127
        %vm867 = vcmp.le.s32.totalorder %v866, %v864
        %v868 = vld [vmem:[#allocation2] sm:$0xf]
        %v869 = vld [vmem:[#allocation3] sm:$0xf]
        %v870 = vld [vmem:[#allocation4] sm:$0xf]
        %v871 = vld [vmem:[#allocation4 + $0x4] sm:$0xf]
        %v872 = vld [vmem:[#allocation4 + $0x8] sm:$0xf]
        %v873 = vld [vmem:[#allocation4 + $0xc] sm:$0xf]
        %vm874 = vcmask 64512
        %v876 = vsel %vm874, %v859, 0
        %v879 = vsel %vm874, %v868, 0
        %881 = vmatprep.subr.bf16.mxu0 0
        %882 = vmatpush1.bf16.xpose.msra.mxu0 0
        %883 = vmatprep.subr.bf16.mxu0 0
        %884 = vmatpush1.bf16.xpose.msra.mxu0 0
        %885 = vmatprep.subr.bf16.mxu0 0
        %886 = vmatpush1.bf16.xpose.msra.mxu0 0
        %887 = vmatprep.subr.bf16.mxu0 0
        %888 = vmatpush1.bf16.xpose.msra.mxu0 0
        %889 = vmatprep.subr.bf16.mxu0 0
        %890 = vmatpush1.bf16.xpose.msra.mxu0 0
        %891 = vmatprep.subr.bf16.mxu0 0
        %892 = vmatpush1.bf16.xpose.msra.mxu0 0
        %893 = vmatprep.subr.bf16.mxu0 0
        %894 = vmatpush1.bf16.xpose.msra.mxu0 0
        %895 = vmatprep.subr.bf16.mxu0 0
        %896 = vmatpush1.bf16.xpose.msra.mxu0 %v879
        %897 = vmatprep.subr.bf16.mxu0 0
        %898 = vmatpush2.bf16.xpose.msra.mxu0 0
        %899 = vmatprep.subr.bf16.mxu0 0
        %900 = vmatpush2.bf16.xpose.msra.mxu0 0
        %901 = vmatprep.subr.bf16.mxu0 0
        %902 = vmatpush2.bf16.xpose.msra.mxu0 0
        %903 = vmatprep.subr.bf16.mxu0 0
        %904 = vmatpush2.bf16.xpose.msra.mxu0 0
        %905 = vmatprep.subr.bf16.mxu0 0
        %906 = vmatpush2.bf16.xpose.msra.mxu0 0
        %907 = vmatprep.subr.bf16.mxu0 0
        %908 = vmatpush2.bf16.xpose.msra.mxu0 0
        %909 = vmatprep.subr.bf16.mxu0 0
        %910 = vmatpush2.bf16.xpose.msra.mxu0 0
        %911 = vmatprep.subr.bf16.mxu0 0
        %912 = vmatpush2.bf16.xpose.msra.mxu0 0
        %913 = vmatprep.mubr.bf16.mxu0 0
        %914 = vmatmul.mubr.bf16.gmra.mxu0 %v876
        %v915 = vpop.f32.mrf.mxu0
        %v916 = vadd.f32 0.0, %v915
        %v917 = vpop.f32.mrf.mxu0
        %v918 = vpop.f32.mrf.mxu0
        %v919 = vpop.f32.mrf.mxu0
        %920 = vdwg.mxu0
        %v921 = vsel %vm867, %v916, -10000.0
        %v922 = vsel %vm874, %v921, -inf
        %923 = vmax.xlane.f32.xlu0 %v922
        %v924 = vpop.xlane.xlu0 %923
        %v925 = vsub.f32 %v921, %v924
        %v926 = vmul.f32 %v925, 1.442695
        %v927 = vpow.pop %v926
        %v928 = vsel %vm874, %v927, 0.0
        %929 = vadd.xlane.f32.xlu0 %v928
        %v930 = vpop.xlane.xlu0 %929
        %v931 = vrcp.pop %v930
        %v932 = vmul.f32 %v927, %v931
        %v933 = vpack.c.bf16 %v932, %v932
        %v935 = vsel %vm874, %v933, 0
        %vm937 = vcmask 1043456
        %v939 = vsel %vm937, %v869, 0
        %941 = vmatprep.subr.bf16.mxu0 0
        %942 = vmatpush1.bf16.msra.mxu0 0
        %943 = vmatprep.subr.bf16.mxu0 0
        %944 = vmatpush1.bf16.msra.mxu0 0
        %945 = vmatprep.subr.bf16.mxu0 0
        %946 = vmatpush1.bf16.msra.mxu0 0
        %947 = vmatprep.subr.bf16.mxu0 0
        %948 = vmatpush1.bf16.msra.mxu0 0
        %949 = vmatprep.subr.bf16.mxu0 0
        %950 = vmatpush1.bf16.msra.mxu0 0
        %951 = vmatprep.subr.bf16.mxu0 0
        %952 = vmatpush1.bf16.msra.mxu0 0
        %953 = vmatprep.subr.bf16.mxu0 0
        %954 = vmatpush1.bf16.msra.mxu0 0
        %955 = vmatprep.subr.bf16.mxu0 0
        %956 = vmatpush1.bf16.msra.mxu0 %v939
        %957 = vmatprep.subr.bf16.mxu0 0
        %958 = vmatpush2.bf16.msra.mxu0 0
        %959 = vmatprep.subr.bf16.mxu0 0
        %960 = vmatpush2.bf16.msra.mxu0 0
        %961 = vmatprep.subr.bf16.mxu0 0
        %962 = vmatpush2.bf16.msra.mxu0 0
        %963 = vmatprep.subr.bf16.mxu0 0
        %964 = vmatpush2.bf16.msra.mxu0 0
        %965 = vmatprep.subr.bf16.mxu0 0
        %966 = vmatpush2.bf16.msra.mxu0 0
        %967 = vmatprep.subr.bf16.mxu0 0
        %968 = vmatpush2.bf16.msra.mxu0 0
        %969 = vmatprep.subr.bf16.mxu0 0
        %970 = vmatpush2.bf16.msra.mxu0 0
        %971 = vmatprep.subr.bf16.mxu0 0
        %972 = vmatpush2.bf16.msra.mxu0 0
        %973 = vmatprep.mubr.bf16.mxu0 0
        %974 = vmatmul.mubr.bf16.gmra.mxu0 %v935
        %v975 = vpop.f32.mrf.mxu0
        %v976 = vadd.f32 0.0, %v975
        %v977 = vpop.f32.mrf.mxu0
        %v978 = vpop.f32.mrf.mxu0
        %v979 = vpop.f32.mrf.mxu0
        %980 = vdwg.mxu0
        %v981 = vpack.c.bf16 %v976, %v976
        %983 = vrot.lane.b32.xlu0 %v859, 120
        %v984 = vpop.permute.xlu0 %983
        %v986 = vunpack.c.l.b16 %v868
        %v987 = vpack.c.b16 %v986, %v986
        %988 = vrot.lane.b32.xlu0 %v987, 120
        %v989 = vpop.permute.xlu0 %988
        %v991 = vsel %vm874, %v984, 0
        %v994 = vsel %vm874, %v989, 0
        %996 = vmatprep.subr.bf16.mxu0 0
        %997 = vmatpush1.bf16.xpose.msra.mxu0 0
        %998 = vmatprep.subr.bf16.mxu0 0
        %999 = vmatpush1.bf16.xpose.msra.mxu0 0
        %1000 = vmatprep.subr.bf16.mxu0 0
        %1001 = vmatpush1.bf16.xpose.msra.mxu0 0
        %1002 = vmatprep.subr.bf16.mxu0 0
        %1003 = vmatpush1.bf16.xpose.msra.mxu0 0
        %1004 = vmatprep.subr.bf16.mxu0 0
        %1005 = vmatpush1.bf16.xpose.msra.mxu0 0
        %1006 = vmatprep.subr.bf16.mxu0 0
        %1007 = vmatpush1.bf16.xpose.msra.mxu0 0
        %1008 = vmatprep.subr.bf16.mxu0 0
        %1009 = vmatpush1.bf16.xpose.msra.mxu0 0
        %1010 = vmatprep.subr.bf16.mxu0 0
        %1011 = vmatpush1.bf16.xpose.msra.mxu0 %v994
        %1012 = vmatprep.subr.bf16.mxu0 0
        %1013 = vmatpush2.bf16.xpose.msra.mxu0 0
        %1014 = vmatprep.subr.bf16.mxu0 0
        %1015 = vmatpush2.bf16.xpose.msra.mxu0 0
        %1016 = vmatprep.subr.bf16.mxu0 0
        %1017 = vmatpush2.bf16.xpose.msra.mxu0 0
        %1018 = vmatprep.subr.bf16.mxu0 0
        %1019 = vmatpush2.bf16.xpose.msra.mxu0 0
        %1020 = vmatprep.subr.bf16.mxu0 0
        %1021 = vmatpush2.bf16.xpose.msra.mxu0 0
        %1022 = vmatprep.subr.bf16.mxu0 0
        %1023 = vmatpush2.bf16.xpose.msra.mxu0 0
        %1024 = vmatprep.subr.bf16.mxu0 0
        %1025 = vmatpush2.bf16.xpose.msra.mxu0 0
        %1026 = vmatprep.subr.bf16.mxu0 0
        %1027 = vmatpush2.bf16.xpose.msra.mxu0 0
        %1028 = vmatprep.mubr.bf16.mxu0 0
        %1029 = vmatmul.mubr.bf16.gmra.mxu0 %v991
        %v1030 = vpop.f32.mrf.mxu0
        %v1031 = vadd.f32 0.0, %v1030
        %v1032 = vpop.f32.mrf.mxu0
        %v1033 = vpop.f32.mrf.mxu0
        %v1034 = vpop.f32.mrf.mxu0
        %1035 = vdwg.mxu0
        %v1036 = vsel %vm867, %v1031, -10000.0
        %v1037 = vsel %vm874, %v1036, -inf
        %1038 = vmax.xlane.f32.xlu0 %v1037
        %v1039 = vpop.xlane.xlu0 %1038
        %v1040 = vsub.f32 %v1036, %v1039
        %v1041 = vmul.f32 %v1040, 1.442695
        %v1042 = vpow.pop %v1041
        %v1043 = vsel %vm874, %v1042, 0.0
        %1044 = vadd.xlane.f32.xlu0 %v1043
        %v1045 = vpop.xlane.xlu0 %1044
        %v1046 = vrcp.pop %v1045
        %v1047 = vmul.f32 %v1042, %v1046
        %v1048 = vpack.c.bf16 %v1047, %v1047
        %v1050 = vunpack.c.l.b16 %v869
        %v1051 = vpack.c.b16 %v1050, %v1050
        %1052 = vrot.lane.b32.xlu0 %v1051, 120
        %v1053 = vpop.permute.xlu0 %1052
        %v1055 = vsel %vm874, %v1048, 0
        %v1058 = vsel %vm937, %v1053, 0
        %1060 = vmatprep.subr.bf16.mxu0 0
        %1061 = vmatpush1.bf16.msra.mxu0 0
        %1062 = vmatprep.subr.bf16.mxu0 0
        %1063 = vmatpush1.bf16.msra.mxu0 0
        %1064 = vmatprep.subr.bf16.mxu0 0
        %1065 = vmatpush1.bf16.msra.mxu0 0
        %1066 = vmatprep.subr.bf16.mxu0 0
        %1067 = vmatpush1.bf16.msra.mxu0 0
        %1068 = vmatprep.subr.bf16.mxu0 0
        %1069 = vmatpush1.bf16.msra.mxu0 0
        %1070 = vmatprep.subr.bf16.mxu0 0
        %1071 = vmatpush1.bf16.msra.mxu0 0
        %1072 = vmatprep.subr.bf16.mxu0 0
        %1073 = vmatpush1.bf16.msra.mxu0 0
        %1074 = vmatprep.subr.bf16.mxu0 0
        %1075 = vmatpush1.bf16.msra.mxu0 %v1058
        %1076 = vmatprep.subr.bf16.mxu0 0
        %1077 = vmatpush2.bf16.msra.mxu0 0
        %1078 = vmatprep.subr.bf16.mxu0 0
        %1079 = vmatpush2.bf16.msra.mxu0 0
        %1080 = vmatprep.subr.bf16.mxu0 0
        %1081 = vmatpush2.bf16.msra.mxu0 0
        %1082 = vmatprep.subr.bf16.mxu0 0
        %1083 = vmatpush2.bf16.msra.mxu0 0
        %1084 = vmatprep.subr.bf16.mxu0 0
        %1085 = vmatpush2.bf16.msra.mxu0 0
        %1086 = vmatprep.subr.bf16.mxu0 0
        %1087 = vmatpush2.bf16.msra.mxu0 0
        %1088 = vmatprep.subr.bf16.mxu0 0
        %1089 = vmatpush2.bf16.msra.mxu0 0
        %1090 = vmatprep.subr.bf16.mxu0 0
        %1091 = vmatpush2.bf16.msra.mxu0 0
        %1092 = vmatprep.mubr.bf16.mxu0 0
        %1093 = vmatmul.mubr.bf16.gmra.mxu0 %v1055
        %v1094 = vpop.f32.mrf.mxu0
        %v1095 = vadd.f32 0.0, %v1094
        %v1096 = vpop.f32.mrf.mxu0
        %v1097 = vpop.f32.mrf.mxu0
        %v1098 = vpop.f32.mrf.mxu0
        %1099 = vdwg.mxu0
        %v1100 = vpack.c.bf16 %v1095, %v1095
        %v1102 = vsel %vm874, %v1100, 0
        %v1105 = vsel %vm937, %v871, 0
        %1107 = vmatprep.subr.bf16.mxu0 0
        %1108 = vmatpush1.bf16.msra.mxu0 0
        %1109 = vmatprep.subr.bf16.mxu0 0
        %1110 = vmatpush1.bf16.msra.mxu0 0
        %1111 = vmatprep.subr.bf16.mxu0 0
        %1112 = vmatpush1.bf16.msra.mxu0 0
        %1113 = vmatprep.subr.bf16.mxu0 0
        %1114 = vmatpush1.bf16.msra.mxu0 0
        %1115 = vmatprep.subr.bf16.mxu0 0
        %1116 = vmatpush1.bf16.msra.mxu0 0
        %1117 = vmatprep.subr.bf16.mxu0 0
        %1118 = vmatpush1.bf16.msra.mxu0 0
        %1119 = vmatprep.subr.bf16.mxu0 0
        %1120 = vmatpush1.bf16.msra.mxu0 0
        %1121 = vmatprep.subr.bf16.mxu0 0
        %1122 = vmatpush1.bf16.msra.mxu0 %v1105
        %1123 = vmatprep.subr.bf16.mxu0 0
        %1124 = vmatpush2.bf16.msra.mxu0 0
        %1125 = vmatprep.subr.bf16.mxu0 0
        %1126 = vmatpush2.bf16.msra.mxu0 0
        %1127 = vmatprep.subr.bf16.mxu0 0
        %1128 = vmatpush2.bf16.msra.mxu0 0
        %1129 = vmatprep.subr.bf16.mxu0 0
        %1130 = vmatpush2.bf16.msra.mxu0 0
        %1131 = vmatprep.subr.bf16.mxu0 0
        %1132 = vmatpush2.bf16.msra.mxu0 0
        %1133 = vmatprep.subr.bf16.mxu0 0
        %1134 = vmatpush2.bf16.msra.mxu0 0
        %1135 = vmatprep.subr.bf16.mxu0 0
        %1136 = vmatpush2.bf16.msra.mxu0 0
        %1137 = vmatprep.subr.bf16.mxu0 0
        %1138 = vmatpush2.bf16.msra.mxu0 0
        %1139 = vmatprep.mubr.bf16.mxu0 0
        %1140 = vmatmul.mubr.bf16.gmra.mxu0 %v1102
        %v1141 = vpop.f32.mrf.mxu0
        %v1142 = vadd.f32 0.0, %v1141
        %v1143 = vpop.f32.mrf.mxu0
        %v1144 = vpop.f32.mrf.mxu0
        %v1145 = vpop.f32.mrf.mxu0
        %1146 = vdwg.mxu0
        %v1148 = vsel %vm874, %v981, 0
        %v1151 = vsel %vm937, %v870, 0
        %1153 = vmatprep.subr.bf16.mxu0 0
        %1154 = vmatpush1.bf16.msra.mxu0 0
        %1155 = vmatprep.subr.bf16.mxu0 0
        %1156 = vmatpush1.bf16.msra.mxu0 0
        %1157 = vmatprep.subr.bf16.mxu0 0
        %1158 = vmatpush1.bf16.msra.mxu0 0
        %1159 = vmatprep.subr.bf16.mxu0 0
        %1160 = vmatpush1.bf16.msra.mxu0 0
        %1161 = vmatprep.subr.bf16.mxu0 0
        %1162 = vmatpush1.bf16.msra.mxu0 0
        %1163 = vmatprep.subr.bf16.mxu0 0
        %1164 = vmatpush1.bf16.msra.mxu0 0
        %1165 = vmatprep.subr.bf16.mxu0 0
        %1166 = vmatpush1.bf16.msra.mxu0 0
        %1167 = vmatprep.subr.bf16.mxu0 0
        %1168 = vmatpush1.bf16.msra.mxu0 %v1151
        %1169 = vmatprep.subr.bf16.mxu0 0
        %1170 = vmatpush2.bf16.msra.mxu0 0
        %1171 = vmatprep.subr.bf16.mxu0 0
        %1172 = vmatpush2.bf16.msra.mxu0 0
        %1173 = vmatprep.subr.bf16.mxu0 0
        %1174 = vmatpush2.bf16.msra.mxu0 0
        %1175 = vmatprep.subr.bf16.mxu0 0
        %1176 = vmatpush2.bf16.msra.mxu0 0
        %1177 = vmatprep.subr.bf16.mxu0 0
        %1178 = vmatpush2.bf16.msra.mxu0 0
        %1179 = vmatprep.subr.bf16.mxu0 0
        %1180 = vmatpush2.bf16.msra.mxu0 0
        %1181 = vmatprep.subr.bf16.mxu0 0
        %1182 = vmatpush2.bf16.msra.mxu0 0
        %1183 = vmatprep.subr.bf16.mxu0 0
        %1184 = vmatpush2.bf16.msra.mxu0 0
        %1185 = vmatprep.mubr.bf16.mxu0 0
        %1186 = vmatmul.mubr.bf16.gmra.mxu0 %v1148
        %v1187 = vpop.f32.mrf.mxu0
        %v1188 = vadd.f32 %v1142, %v1187
        %v1189 = vpop.f32.mrf.mxu0
        %v1190 = vpop.f32.mrf.mxu0
        %v1191 = vpop.f32.mrf.mxu0
        %1192 = vdwg.mxu0
        %1193 = vrot.lane.b32.xlu0 %v859, 112
        %v1194 = vpop.permute.xlu0 %1193
        %1195 = vrot.lane.b32.xlu0 %v987, 112
        %v1196 = vpop.permute.xlu0 %1195
        %v1198 = vsel %vm874, %v1194, 0
        %v1201 = vsel %vm874, %v1196, 0
        %1203 = vmatprep.subr.bf16.mxu0 0
        %1204 = vmatpush1.bf16.xpose.msra.mxu0 0
        %1205 = vmatprep.subr.bf16.mxu0 0
        %1206 = vmatpush1.bf16.xpose.msra.mxu0 0
        %1207 = vmatprep.subr.bf16.mxu0 0
        %1208 = vmatpush1.bf16.xpose.msra.mxu0 0
        %1209 = vmatprep.subr.bf16.mxu0 0
        %1210 = vmatpush1.bf16.xpose.msra.mxu0 0
        %1211 = vmatprep.subr.bf16.mxu0 0
        %1212 = vmatpush1.bf16.xpose.msra.mxu0 0
        %1213 = vmatprep.subr.bf16.mxu0 0
        %1214 = vmatpush1.bf16.xpose.msra.mxu0 0
        %1215 = vmatprep.subr.bf16.mxu0 0
        %1216 = vmatpush1.bf16.xpose.msra.mxu0 0
        %1217 = vmatprep.subr.bf16.mxu0 0
        %1218 = vmatpush1.bf16.xpose.msra.mxu0 %v1201
        %1219 = vmatprep.subr.bf16.mxu0 0
        %1220 = vmatpush2.bf16.xpose.msra.mxu0 0
        %1221 = vmatprep.subr.bf16.mxu0 0
        %1222 = vmatpush2.bf16.xpose.msra.mxu0 0
        %1223 = vmatprep.subr.bf16.mxu0 0
        %1224 = vmatpush2.bf16.xpose.msra.mxu0 0
        %1225 = vmatprep.subr.bf16.mxu0 0
        %1226 = vmatpush2.bf16.xpose.msra.mxu0 0
        %1227 = vmatprep.subr.bf16.mxu0 0
        %1228 = vmatpush2.bf16.xpose.msra.mxu0 0
        %1229 = vmatprep.subr.bf16.mxu0 0
        %1230 = vmatpush2.bf16.xpose.msra.mxu0 0
        %1231 = vmatprep.subr.bf16.mxu0 0
        %1232 = vmatpush2.bf16.xpose.msra.mxu0 0
        %1233 = vmatprep.subr.bf16.mxu0 0
        %1234 = vmatpush2.bf16.xpose.msra.mxu0 0
        %1235 = vmatprep.mubr.bf16.mxu0 0
        %1236 = vmatmul.mubr.bf16.gmra.mxu0 %v1198
        %v1237 = vpop.f32.mrf.mxu0
        %v1238 = vadd.f32 0.0, %v1237
        %v1239 = vpop.f32.mrf.mxu0
        %v1240 = vpop.f32.mrf.mxu0
        %v1241 = vpop.f32.mrf.mxu0
        %1242 = vdwg.mxu0
        %v1243 = vsel %vm867, %v1238, -10000.0
        %v1244 = vsel %vm874, %v1243, -inf
        %1245 = vmax.xlane.f32.xlu0 %v1244
        %v1246 = vpop.xlane.xlu0 %1245
        %v1247 = vsub.f32 %v1243, %v1246
        %v1248 = vmul.f32 %v1247, 1.442695
        %v1249 = vpow.pop %v1248
        %v1250 = vsel %vm874, %v1249, 0.0
        %1251 = vadd.xlane.f32.xlu0 %v1250
        %v1252 = vpop.xlane.xlu0 %1251
        %v1253 = vrcp.pop %v1252
        %v1254 = vmul.f32 %v1249, %v1253
        %v1255 = vpack.c.bf16 %v1254, %v1254
        %1256 = vrot.lane.b32.xlu0 %v1051, 112
        %v1257 = vpop.permute.xlu0 %1256
        %v1259 = vsel %vm874, %v1255, 0
        %v1262 = vsel %vm937, %v1257, 0
        %1264 = vmatprep.subr.bf16.mxu0 0
        %1265 = vmatpush1.bf16.msra.mxu0 0
        %1266 = vmatprep.subr.bf16.mxu0 0
        %1267 = vmatpush1.bf16.msra.mxu0 0
        %1268 = vmatprep.subr.bf16.mxu0 0
        %1269 = vmatpush1.bf16.msra.mxu0 0
        %1270 = vmatprep.subr.bf16.mxu0 0
        %1271 = vmatpush1.bf16.msra.mxu0 0
        %1272 = vmatprep.subr.bf16.mxu0 0
        %1273 = vmatpush1.bf16.msra.mxu0 0
        %1274 = vmatprep.subr.bf16.mxu0 0
        %1275 = vmatpush1.bf16.msra.mxu0 0
        %1276 = vmatprep.subr.bf16.mxu0 0
        %1277 = vmatpush1.bf16.msra.mxu0 0
        %1278 = vmatprep.subr.bf16.mxu0 0
        %1279 = vmatpush1.bf16.msra.mxu0 %v1262
        %1280 = vmatprep.subr.bf16.mxu0 0
        %1281 = vmatpush2.bf16.msra.mxu0 0
        %1282 = vmatprep.subr.bf16.mxu0 0
        %1283 = vmatpush2.bf16.msra.mxu0 0
        %1284 = vmatprep.subr.bf16.mxu0 0
        %1285 = vmatpush2.bf16.msra.mxu0 0
        %1286 = vmatprep.subr.bf16.mxu0 0
        %1287 = vmatpush2.bf16.msra.mxu0 0
        %1288 = vmatprep.subr.bf16.mxu0 0
        %1289 = vmatpush2.bf16.msra.mxu0 0
        %1290 = vmatprep.subr.bf16.mxu0 0
        %1291 = vmatpush2.bf16.msra.mxu0 0
        %1292 = vmatprep.subr.bf16.mxu0 0
        %1293 = vmatpush2.bf16.msra.mxu0 0
        %1294 = vmatprep.subr.bf16.mxu0 0
        %1295 = vmatpush2.bf16.msra.mxu0 0
        %1296 = vmatprep.mubr.bf16.mxu0 0
        %1297 = vmatmul.mubr.bf16.gmra.mxu0 %v1259
        %v1298 = vpop.f32.mrf.mxu0
        %v1299 = vadd.f32 0.0, %v1298
        %v1300 = vpop.f32.mrf.mxu0
        %v1301 = vpop.f32.mrf.mxu0
        %v1302 = vpop.f32.mrf.mxu0
        %1303 = vdwg.mxu0
        %v1304 = vpack.c.bf16 %v1299, %v1299
        %v1306 = vsel %vm874, %v1304, 0
        %v1309 = vsel %vm937, %v872, 0
        %1311 = vmatprep.subr.bf16.mxu0 0
        %1312 = vmatpush1.bf16.msra.mxu0 0
        %1313 = vmatprep.subr.bf16.mxu0 0
        %1314 = vmatpush1.bf16.msra.mxu0 0
        %1315 = vmatprep.subr.bf16.mxu0 0
        %1316 = vmatpush1.bf16.msra.mxu0 0
        %1317 = vmatprep.subr.bf16.mxu0 0
        %1318 = vmatpush1.bf16.msra.mxu0 0
        %1319 = vmatprep.subr.bf16.mxu0 0
        %1320 = vmatpush1.bf16.msra.mxu0 0
        %1321 = vmatprep.subr.bf16.mxu0 0
        %1322 = vmatpush1.bf16.msra.mxu0 0
        %1323 = vmatprep.subr.bf16.mxu0 0
        %1324 = vmatpush1.bf16.msra.mxu0 0
        %1325 = vmatprep.subr.bf16.mxu0 0
        %1326 = vmatpush1.bf16.msra.mxu0 %v1309
        %1327 = vmatprep.subr.bf16.mxu0 0
        %1328 = vmatpush2.bf16.msra.mxu0 0
        %1329 = vmatprep.subr.bf16.mxu0 0
        %1330 = vmatpush2.bf16.msra.mxu0 0
        %1331 = vmatprep.subr.bf16.mxu0 0
        %1332 = vmatpush2.bf16.msra.mxu0 0
        %1333 = vmatprep.subr.bf16.mxu0 0
        %1334 = vmatpush2.bf16.msra.mxu0 0
        %1335 = vmatprep.subr.bf16.mxu0 0
        %1336 = vmatpush2.bf16.msra.mxu0 0
        %1337 = vmatprep.subr.bf16.mxu0 0
        %1338 = vmatpush2.bf16.msra.mxu0 0
        %1339 = vmatprep.subr.bf16.mxu0 0
        %1340 = vmatpush2.bf16.msra.mxu0 0
        %1341 = vmatprep.subr.bf16.mxu0 0
        %1342 = vmatpush2.bf16.msra.mxu0 0
        %1343 = vmatprep.mubr.bf16.mxu0 0
        %1344 = vmatmul.mubr.bf16.gmra.mxu0 %v1306
        %v1345 = vpop.f32.mrf.mxu0
        %v1346 = vadd.f32 0.0, %v1345
        %v1347 = vpop.f32.mrf.mxu0
        %v1348 = vpop.f32.mrf.mxu0
        %v1349 = vpop.f32.mrf.mxu0
        %1350 = vdwg.mxu0
        %v1351 = vadd.f32 %v1188, %v1346
        %1352 = vrot.lane.b32.xlu0 %v859, 104
        %v1353 = vpop.permute.xlu0 %1352
        %1354 = vrot.lane.b32.xlu0 %v987, 104
        %v1355 = vpop.permute.xlu0 %1354
        %v1357 = vsel %vm874, %v1353, 0
        %v1360 = vsel %vm874, %v1355, 0
        %1362 = vmatprep.subr.bf16.mxu0 0
        %1363 = vmatpush1.bf16.xpose.msra.mxu0 0
        %1364 = vmatprep.subr.bf16.mxu0 0
        %1365 = vmatpush1.bf16.xpose.msra.mxu0 0
        %1366 = vmatprep.subr.bf16.mxu0 0
        %1367 = vmatpush1.bf16.xpose.msra.mxu0 0
        %1368 = vmatprep.subr.bf16.mxu0 0
        %1369 = vmatpush1.bf16.xpose.msra.mxu0 0
        %1370 = vmatprep.subr.bf16.mxu0 0
        %1371 = vmatpush1.bf16.xpose.msra.mxu0 0
        %1372 = vmatprep.subr.bf16.mxu0 0
        %1373 = vmatpush1.bf16.xpose.msra.mxu0 0
        %1374 = vmatprep.subr.bf16.mxu0 0
        %1375 = vmatpush1.bf16.xpose.msra.mxu0 0
        %1376 = vmatprep.subr.bf16.mxu0 0
        %1377 = vmatpush1.bf16.xpose.msra.mxu0 %v1360
        %1378 = vmatprep.subr.bf16.mxu0 0
        %1379 = vmatpush2.bf16.xpose.msra.mxu0 0
        %1380 = vmatprep.subr.bf16.mxu0 0
        %1381 = vmatpush2.bf16.xpose.msra.mxu0 0
        %1382 = vmatprep.subr.bf16.mxu0 0
        %1383 = vmatpush2.bf16.xpose.msra.mxu0 0
        %1384 = vmatprep.subr.bf16.mxu0 0
        %1385 = vmatpush2.bf16.xpose.msra.mxu0 0
        %1386 = vmatprep.subr.bf16.mxu0 0
        %1387 = vmatpush2.bf16.xpose.msra.mxu0 0
        %1388 = vmatprep.subr.bf16.mxu0 0
        %1389 = vmatpush2.bf16.xpose.msra.mxu0 0
        %1390 = vmatprep.subr.bf16.mxu0 0
        %1391 = vmatpush2.bf16.xpose.msra.mxu0 0
        %1392 = vmatprep.subr.bf16.mxu0 0
        %1393 = vmatpush2.bf16.xpose.msra.mxu0 0
        %1394 = vmatprep.mubr.bf16.mxu0 0
        %1395 = vmatmul.mubr.bf16.gmra.mxu0 %v1357
        %v1396 = vpop.f32.mrf.mxu0
        %v1397 = vadd.f32 0.0, %v1396
        %v1398 = vpop.f32.mrf.mxu0
        %v1399 = vpop.f32.mrf.mxu0
        %v1400 = vpop.f32.mrf.mxu0
        %1401 = vdwg.mxu0
        %v1402 = vsel %vm867, %v1397, -10000.0
        %v1403 = vsel %vm874, %v1402, -inf
        %1404 = vmax.xlane.f32.xlu0 %v1403
        %v1405 = vpop.xlane.xlu0 %1404
        %v1406 = vsub.f32 %v1402, %v1405
        %v1407 = vmul.f32 %v1406, 1.442695
        %v1408 = vpow.pop %v1407
        %v1409 = vsel %vm874, %v1408, 0.0
        %1410 = vadd.xlane.f32.xlu0 %v1409
        %v1411 = vpop.xlane.xlu0 %1410
        %v1412 = vrcp.pop %v1411
        %v1413 = vmul.f32 %v1408, %v1412
        %v1414 = vpack.c.bf16 %v1413, %v1413
        %1415 = vrot.lane.b32.xlu0 %v1051, 104
        %v1416 = vpop.permute.xlu0 %1415
        %v1418 = vsel %vm874, %v1414, 0
        %v1421 = vsel %vm937, %v1416, 0
        %1423 = vmatprep.subr.bf16.mxu0 0
        %1424 = vmatpush1.bf16.msra.mxu0 0
        %1425 = vmatprep.subr.bf16.mxu0 0
        %1426 = vmatpush1.bf16.msra.mxu0 0
        %1427 = vmatprep.subr.bf16.mxu0 0
        %1428 = vmatpush1.bf16.msra.mxu0 0
        %1429 = vmatprep.subr.bf16.mxu0 0
        %1430 = vmatpush1.bf16.msra.mxu0 0
        %1431 = vmatprep.subr.bf16.mxu0 0
        %1432 = vmatpush1.bf16.msra.mxu0 0
        %1433 = vmatprep.subr.bf16.mxu0 0
        %1434 = vmatpush1.bf16.msra.mxu0 0
        %1435 = vmatprep.subr.bf16.mxu0 0
        %1436 = vmatpush1.bf16.msra.mxu0 0
        %1437 = vmatprep.subr.bf16.mxu0 0
        %1438 = vmatpush1.bf16.msra.mxu0 %v1421
        %1439 = vmatprep.subr.bf16.mxu0 0
        %1440 = vmatpush2.bf16.msra.mxu0 0
        %1441 = vmatprep.subr.bf16.mxu0 0
        %1442 = vmatpush2.bf16.msra.mxu0 0
        %1443 = vmatprep.subr.bf16.mxu0 0
        %1444 = vmatpush2.bf16.msra.mxu0 0
        %1445 = vmatprep.subr.bf16.mxu0 0
        %1446 = vmatpush2.bf16.msra.mxu0 0
        %1447 = vmatprep.subr.bf16.mxu0 0
        %1448 = vmatpush2.bf16.msra.mxu0 0
        %1449 = vmatprep.subr.bf16.mxu0 0
        %1450 = vmatpush2.bf16.msra.mxu0 0
        %1451 = vmatprep.subr.bf16.mxu0 0
        %1452 = vmatpush2.bf16.msra.mxu0 0
        %1453 = vmatprep.subr.bf16.mxu0 0
        %1454 = vmatpush2.bf16.msra.mxu0 0
        %1455 = vmatprep.mubr.bf16.mxu0 0
        %1456 = vmatmul.mubr.bf16.gmra.mxu0 %v1418
        %v1457 = vpop.f32.mrf.mxu0
        %v1458 = vadd.f32 0.0, %v1457
        %v1459 = vpop.f32.mrf.mxu0
        %v1460 = vpop.f32.mrf.mxu0
        %v1461 = vpop.f32.mrf.mxu0
        %1462 = vdwg.mxu0
        %v1463 = vpack.c.bf16 %v1458, %v1458
        %v1465 = vsel %vm874, %v1463, 0
        %v1468 = vsel %vm937, %v873, 0
        %1470 = vmatprep.subr.bf16.mxu0 0
        %1471 = vmatpush1.bf16.msra.mxu0 0
        %1472 = vmatprep.subr.bf16.mxu0 0
        %1473 = vmatpush1.bf16.msra.mxu0 0
        %1474 = vmatprep.subr.bf16.mxu0 0
        %1475 = vmatpush1.bf16.msra.mxu0 0
        %1476 = vmatprep.subr.bf16.mxu0 0
        %1477 = vmatpush1.bf16.msra.mxu0 0
        %1478 = vmatprep.subr.bf16.mxu0 0
        %1479 = vmatpush1.bf16.msra.mxu0 0
        %1480 = vmatprep.subr.bf16.mxu0 0
        %1481 = vmatpush1.bf16.msra.mxu0 0
        %1482 = vmatprep.subr.bf16.mxu0 0
        %1483 = vmatpush1.bf16.msra.mxu0 0
        %1484 = vmatprep.subr.bf16.mxu0 0
        %1485 = vmatpush1.bf16.msra.mxu0 %v1468
        %1486 = vmatprep.subr.bf16.mxu0 0
        %1487 = vmatpush2.bf16.msra.mxu0 0
        %1488 = vmatprep.subr.bf16.mxu0 0
        %1489 = vmatpush2.bf16.msra.mxu0 0
        %1490 = vmatprep.subr.bf16.mxu0 0
        %1491 = vmatpush2.bf16.msra.mxu0 0
        %1492 = vmatprep.subr.bf16.mxu0 0
        %1493 = vmatpush2.bf16.msra.mxu0 0
        %1494 = vmatprep.subr.bf16.mxu0 0
        %1495 = vmatpush2.bf16.msra.mxu0 0
        %1496 = vmatprep.subr.bf16.mxu0 0
        %1497 = vmatpush2.bf16.msra.mxu0 0
        %1498 = vmatprep.subr.bf16.mxu0 0
        %1499 = vmatpush2.bf16.msra.mxu0 0
        %1500 = vmatprep.subr.bf16.mxu0 0
        %1501 = vmatpush2.bf16.msra.mxu0 0
        %1502 = vmatprep.mubr.bf16.mxu0 0
        %1503 = vmatmul.mubr.bf16.gmra.mxu0 %v1465
        %v1504 = vpop.f32.mrf.mxu0
        %v1505 = vadd.f32 0.0, %v1504
        %v1506 = vpop.f32.mrf.mxu0
        %v1507 = vpop.f32.mrf.mxu0
        %v1508 = vpop.f32.mrf.mxu0
        %1509 = vdwg.mxu0
        %v1510 = vadd.f32 %v1351, %v1505
        %v1511 = vld [vmem:[%s9] sm:$0x1]
        %v1513 = vlaneseq
        %v1514 = vshrl.u32 %v1513, 7
        %v1515 = vsub.s32 0, %v1514
        %v1516 = vrot.slane %v1511, %v1515
        %v1518 = vadd.f32 %v1510, %v1516
        %v1519 = vadd.f32 %v789, %v1518
        %v1520 = vld [vmem:[%s10] sm:$0x1]
        %v1521 = vld [vmem:[%s11] sm:$0x1]
        %v1522 = vsel %vm814, %v1519, 0.0
        %1523 = vadd.xlane.f32.xlu0 %v1522
        %v1524 = vpop.xlane.xlu0 %1523
        %v1525 = vrcp.pop 32.0
        %v1526 = vmul.f32 %v1524, %v1525
        %v1527 = vsub.f32 %v1519, %v1526
        %v1528 = vmul.f32 %v1527, %v1527
        %v1529 = vsel %vm814, %v1528, 0.0
        %1530 = vadd.xlane.f32.xlu0 %v1529
        %v1531 = vpop.xlane.xlu0 %1530
        %v1532 = vmul.f32 %v1531, %v1525
        %v1533 = vadd.f32 %v1532, 1e-05
        %v1534 = vrsqrt.pop %v1533
        %v1535 = vmul.f32 %v1527, %v1534
        %v1537 = vlaneseq
        %v1538 = vshrl.u32 %v1537, 7
        %v1539 = vsub.s32 0, %v1538
        %v1540 = vrot.slane %v1520, %v1539
        %v1542 = vmul.f32 %v1535, %v1540
        %v1544 = vlaneseq
        %v1545 = vshrl.u32 %v1544, 7
        %v1546 = vsub.s32 0, %v1545
        %v1547 = vrot.slane %v1521, %v1546
        %v1549 = vadd.f32 %v1542, %v1547
        %v1550 = vpack.c.bf16 %v1549, %v1549
        %v1551 = vld [vmem:[#allocation7] sm:$0xf]
        %v1552 = vld [vmem:[#allocation7 + $0x4] sm:$0xf]
        %v1553 = vld [vmem:[#allocation7 + $0x8] sm:$0xf]
        %v1554 = vld [vmem:[#allocation7 + $0xc] sm:$0xf]
        %v1555 = vld [vmem:[%s13] sm:$0x1]
        %v1557 = vlaneseq
        %v1558 = vshrl.u32 %v1557, 7
        %v1559 = vsub.s32 0, %v1558
        %v1560 = vrot.slane %v1555, %v1559
        %v1566 = vunpack.c.l.b16 %v1551
        %v1567 = vunpack.c.l.b16 %v1552
        %v1568 = vunpack.c.l.b16 %v1553
        %v1569 = vunpack.c.l.b16 %v1554
        %v1570 = vpack.c.b16 %v1567, %v1566
        %v1571 = vpack.c.b16 %v1569, %v1568
        %v1575 = vsel %vm814, %v1550, 0
        %1577 = vmatprep.subr.bf16.mxu0 0
        %1578 = vmatpush1.bf16.msra.mxu0 0
        %1579 = vmatprep.subr.bf16.mxu0 0
        %1580 = vmatpush1.bf16.msra.mxu0 0
        %1581 = vmatprep.subr.bf16.mxu0 0
        %1582 = vmatpush1.bf16.msra.mxu0 0
        %1583 = vmatprep.subr.bf16.mxu0 0
        %1584 = vmatpush1.bf16.msra.mxu0 0
        %1585 = vmatprep.subr.bf16.mxu0 0
        %1586 = vmatpush1.bf16.msra.mxu0 0
        %1587 = vmatprep.subr.bf16.mxu0 0
        %1588 = vmatpush1.bf16.msra.mxu0 0
        %1589 = vmatprep.subr.bf16.mxu0 0
        %1590 = vmatpush1.bf16.msra.mxu0 %v1571
        %1591 = vmatprep.subr.bf16.mxu0 0
        %1592 = vmatpush1.bf16.msra.mxu0 %v1570
        %1593 = vmatprep.subr.bf16.mxu0 0
        %1594 = vmatpush2.bf16.msra.mxu0 0
        %1595 = vmatprep.subr.bf16.mxu0 0
        %1596 = vmatpush2.bf16.msra.mxu0 0
        %1597 = vmatprep.subr.bf16.mxu0 0
        %1598 = vmatpush2.bf16.msra.mxu0 0
        %1599 = vmatprep.subr.bf16.mxu0 0
        %1600 = vmatpush2.bf16.msra.mxu0 0
        %1601 = vmatprep.subr.bf16.mxu0 0
        %1602 = vmatpush2.bf16.msra.mxu0 0
        %1603 = vmatprep.subr.bf16.mxu0 0
        %1604 = vmatpush2.bf16.msra.mxu0 0
        %1605 = vmatprep.subr.bf16.mxu0 0
        %1606 = vmatpush2.bf16.msra.mxu0 0
        %1607 = vmatprep.subr.bf16.mxu0 0
        %1608 = vmatpush2.bf16.msra.mxu0 0
        %1609 = vmatprep.mubr.bf16.mxu0 0
        %1610 = vmatmul.mubr.bf16.gmra.mxu0 %v1575
        %v1611 = vpop.f32.mrf.mxu0
        %v1612 = vadd.f32 %v1560, %v1611
        %v1613 = vpop.f32.mrf.mxu0
        %v1614 = vpop.f32.mrf.mxu0
        %v1615 = vpop.f32.mrf.mxu0
        %1616 = vdwg.mxu0
        %v1617 = vpack.c.bf16 %v1612, %v1612
        %v1618 = vmul.bf16 %v1617, 1056980736
        %v1619 = vmul.bf16 %v1617, 1027030327
        %v1620 = vmul.bf16 %v1619, %v1617
        %v1621 = vmul.bf16 %v1620, %v1617
        %v1622 = vadd.bf16 %v1617, %v1621
        %v1623 = vmul.bf16 %v1622, 1061961548
        %v1624 = vtanh.bf16.pop %v1623
        %v1625 = vadd.bf16 %v1624, 1065369472
        %v1626 = vmul.bf16 %v1618, %v1625
        %v1627 = vld [vmem:[%s14] sm:$0xf]
        %v1628 = vld [vmem:[%s14 + $0x4] sm:$0xf]
        %v1629 = vld [vmem:[%s14 + $0x8] sm:$0xf]
        %v1630 = vld [vmem:[%s14 + $0xc] sm:$0xf]
        %v1631 = vld [vmem:[%s14 + $0x10] sm:$0xf]
        %v1632 = vld [vmem:[%s14 + $0x14] sm:$0xf]
        %v1633 = vld [vmem:[%s14 + $0x18] sm:$0xf]
        %v1634 = vld [vmem:[%s14 + $0x1c] sm:$0xf]
        %v1635 = vld [vmem:[%s14 + $0x20] sm:$0xf]
        %v1636 = vld [vmem:[%s14 + $0x24] sm:$0xf]
        %v1637 = vld [vmem:[%s14 + $0x28] sm:$0xf]
        %v1638 = vld [vmem:[%s14 + $0x2c] sm:$0xf]
        %v1639 = vld [vmem:[%s14 + $0x30] sm:$0xf]
        %v1640 = vld [vmem:[%s14 + $0x34] sm:$0xf]
        %v1641 = vld [vmem:[%s14 + $0x38] sm:$0xf]
        %v1642 = vld [vmem:[%s14 + $0x3c] sm:$0xf]
        %v1643 = vld [vmem:[%s15] sm:$0x1]
        %v1645 = vlaneseq
        %v1646 = vshrl.u32 %v1645, 7
        %v1647 = vsub.s32 0, %v1646
        %v1648 = vrot.slane %v1643, %v1647
        %v1666 = vunpack.c.l.b16 %v1627
        %v1667 = vunpack.c.l.b16 %v1628
        %v1668 = vunpack.c.l.b16 %v1629
        %v1669 = vunpack.c.l.b16 %v1630
        %v1670 = vunpack.c.l.b16 %v1631
        %v1671 = vunpack.c.l.b16 %v1632
        %v1672 = vunpack.c.l.b16 %v1633
        %v1673 = vunpack.c.l.b16 %v1634
        %v1674 = vunpack.c.l.b16 %v1635
        %v1675 = vunpack.c.l.b16 %v1636
        %v1676 = vunpack.c.l.b16 %v1637
        %v1677 = vunpack.c.l.b16 %v1638
        %v1678 = vunpack.c.l.b16 %v1639
        %v1679 = vunpack.c.l.b16 %v1640
        %v1680 = vunpack.c.l.b16 %v1641
        %v1681 = vunpack.c.l.b16 %v1642
        %v1682 = vpack.c.b16 %v1667, %v1666
        %v1683 = vpack.c.b16 %v1669, %v1668
        %v1684 = vpack.c.b16 %v1671, %v1670
        %v1685 = vpack.c.b16 %v1673, %v1672
        %v1686 = vpack.c.b16 %v1675, %v1674
        %v1687 = vpack.c.b16 %v1677, %v1676
        %v1688 = vpack.c.b16 %v1679, %v1678
        %v1689 = vpack.c.b16 %v1681, %v1680
        %1698 = vmatprep.subr.bf16.mxu0 0
        %1699 = vmatpush1.bf16.msra.mxu0 %v1689
        %1700 = vmatprep.subr.bf16.mxu0 0
        %1701 = vmatpush1.bf16.msra.mxu0 %v1688
        %1702 = vmatprep.subr.bf16.mxu0 0
        %1703 = vmatpush1.bf16.msra.mxu0 %v1687
        %1704 = vmatprep.subr.bf16.mxu0 0
        %1705 = vmatpush1.bf16.msra.mxu0 %v1686
        %1706 = vmatprep.subr.bf16.mxu0 0
        %1707 = vmatpush1.bf16.msra.mxu0 %v1685
        %1708 = vmatprep.subr.bf16.mxu0 0
        %1709 = vmatpush1.bf16.msra.mxu0 %v1684
        %1710 = vmatprep.subr.bf16.mxu0 0
        %1711 = vmatpush1.bf16.msra.mxu0 %v1683
        %1712 = vmatprep.subr.bf16.mxu0 0
        %1713 = vmatpush1.bf16.msra.mxu0 %v1682
        %1714 = vmatprep.subr.bf16.mxu0 0
        %1715 = vmatpush2.bf16.msra.mxu0 0
        %1716 = vmatprep.subr.bf16.mxu0 0
        %1717 = vmatpush2.bf16.msra.mxu0 0
        %1718 = vmatprep.subr.bf16.mxu0 0
        %1719 = vmatpush2.bf16.msra.mxu0 0
        %1720 = vmatprep.subr.bf16.mxu0 0
        %1721 = vmatpush2.bf16.msra.mxu0 0
        %1722 = vmatprep.subr.bf16.mxu0 0
        %1723 = vmatpush2.bf16.msra.mxu0 0
        %1724 = vmatprep.subr.bf16.mxu0 0
        %1725 = vmatpush2.bf16.msra.mxu0 0
        %1726 = vmatprep.subr.bf16.mxu0 0
        %1727 = vmatpush2.bf16.msra.mxu0 0
        %1728 = vmatprep.subr.bf16.mxu0 0
        %1729 = vmatpush2.bf16.msra.mxu0 0
        %1730 = vmatprep.mubr.bf16.mxu0 0
        %1731 = vmatmul.mubr.bf16.gmra.mxu0 %v1626
        %v1732 = vpop.f32.mrf.mxu0
        %v1733 = vadd.f32 %v1648, %v1732
        %v1734 = vpop.f32.mrf.mxu0
        %v1735 = vpop.f32.mrf.mxu0
        %v1736 = vpop.f32.mrf.mxu0
        %1737 = vdwg.mxu0
        %v1738 = vadd.f32 %v1549, %v1733
        %v1739 = vld [vmem:[%s16] sm:$0x1]
        %v1740 = vld [vmem:[%s17] sm:$0x1]
        %v1741 = vsel %vm814, %v1738, 0.0
        %1742 = vadd.xlane.f32.xlu0 %v1741
        %v1743 = vpop.xlane.xlu0 %1742
        %v1744 = vmul.f32 %v1743, %v1525
        %v1745 = vsub.f32 %v1738, %v1744
        %v1746 = vmul.f32 %v1745, %v1745
        %v1747 = vsel %vm814, %v1746, 0.0
        %1748 = vadd.xlane.f32.xlu0 %v1747
        %v1749 = vpop.xlane.xlu0 %1748
        %v1750 = vmul.f32 %v1749, %v1525
        %v1751 = vadd.f32 %v1750, 1e-05
        %v1752 = vrsqrt.pop %v1751
        %v1753 = vmul.f32 %v1745, %v1752
        %v1755 = vlaneseq
        %v1756 = vshrl.u32 %v1755, 7
        %v1757 = vsub.s32 0, %v1756
        %v1758 = vrot.slane %v1739, %v1757
        %v1760 = vmul.f32 %v1753, %v1758
        %v1762 = vlaneseq
        %v1763 = vshrl.u32 %v1762, 7
        %v1764 = vsub.s32 0, %v1763
        %v1765 = vrot.slane %v1740, %v1764
        %v1767 = vadd.f32 %v1760, %v1765
        %1768 = vst.msk [vmem:[%s631] sm:$0xff] %vm814, %v1767
        %s1769 = sand.u32 %s446, 1
        %s1770 = scalar_lea.sflag [#allocation6], %s1769
        %s1771 = sand.u32 %s446, 1
        %s1772 = smul.addr %s1771, 8
        %s1773 = scalar_lea.vmem [#allocation9], %s1772
        // Predicated region
        $region105: #{tpu_custom_call.1} parent=91 // pred_check
          %p1774 = pneg %p456
        $region106: #{tpu_custom_call.1} parent=91 // pred_check_branch
          %1776 = sbr.rel (%p1774) target = $region108
        $region107: #{tpu_custom_call.1} parent=91 // pred_region
          %s1778 = ssub.s32 128, 128
          %1779 = vsyncadd %s1770, %s1778
          %s1780 = sadd.s32 %s39, %s38
          %s1781 = smul.addr %s1780, 128
          %s1782 = scalar_lea.hbm %s18, %s1781
          %s1784 = sshll.u32 %s1773, 4
          %s1785 = int_to_ptr.vmem [resolvable:$true] %s1784
          %1787 = dma.vmem_to_hbm [thread:$0]  %s1785, 128, %s1782, %s1770
        $region108: #{tpu_custom_call.1} parent=91 // pred_fallthru
          _
      $region92: #{tpu_custom_call.1} parent=5 // pred_fallthru
        _
      %p1788 = scmp.le.s32.totalorder 2, %s29
      // Predicated region
      $region109: #{tpu_custom_call.1} parent=5 // pred_check
        %p1789 = pneg %p1788
      $region110: #{tpu_custom_call.1} parent=5 // pred_check_branch
        %1791 = sbr.rel (%p1789) target = $region112
      $region111: #{tpu_custom_call.1} parent=5 // pred_region
        %s1792 = ssub.s32 %s29, 2
        // Predicated region
        $region113: #{tpu_custom_call.1} parent=111 // pred_check
          %p1793 = pneg %p462
        $region114: #{tpu_custom_call.1} parent=111 // pred_check_branch
          %1795 = sbr.rel (%p1793) target = $region116
        $region115: #{tpu_custom_call.1} parent=111 // pred_region
          %s1796 = sand.u32 %s447, 1
          %s1797 = scalar_lea.sflag [#allocation6], %s1796
          %s1798 = sand.u32 %s447, 1
          %s1799 = smul.addr %s1798, 8
          %s1800 = scalar_lea.vmem [#allocation9], %s1799
          %1801 = dma.done %s1797, 128
        $region116: #{tpu_custom_call.1} parent=111 // pred_fallthru
          _
      $region112: #{tpu_custom_call.1} parent=5 // pred_fallthru
        _
    $region6: #{tpu_custom_call.1} parent=1 // loop_footer
      %s33 = sadd.s32 1, %s29
    $region7: #{tpu_custom_call.1} parent=1 // loop_footer_branch
      %28 = sbr.rel target = $region3
    $region8: #{tpu_custom_call.1} parent=1 // loop_exit
      _
    %1802 = vsyncpa [#allocation5], 1
    %s1803 = scalar_lea.sflag [#allocation5], 1
    %1804 = vsyncpa %s1803, 1
    %1805 = vsyncpa [#allocation8], 1
    %1806 = vsyncpa [#allocation6], 1
    %s1807 = scalar_lea.sflag [#allocation6], 1
    %1808 = vsyncpa %s1807, 1

</llo_original>
